<compile_context>
chip_gen: v7x
topology: tpu7x:2x2x1
jax: 0.10.0
libtpu: 0.0.40
codegen_flags: <defaults>
</compile_context>

<pallas_src>
import jax
import jax.numpy as jnp
from jax import lax
from jax.experimental import pallas as pl
from jax.experimental.pallas import tpu as pltpu

BN_EPS = 1e-5


# --------------------------- fused Pallas kernel ----------------------------
def _make_fused_kernel(N, H, W, C):
    """Build the fused 3-layer kernel body for fixed (N, H, W, C)."""
    Wp = W + 2
    L = Wp * C                       # lane width of the row-strip layout
    inv_count = 1.0 / float(N * H * W)

    def kernel(x_ref, w_ref, b_ref, g_ref, bt_ref, avg_ref, o_ref):
        # x_ref   : (N, H+2, L)   zero-padded input strip (halo rows/cols = 0)
        # w_ref   : (9, L, L)     banded conv matrices, index = layer*3 + kh
        # b_ref   : (3, 1, L)     conv bias, tiled over pixels (0 on halo)
        # g_ref   : (3, 1, L)     BN gamma,  tiled over pixels (0 on halo)
        # bt_ref  : (3, 1, L)     BN beta,   tiled over pixels (0 on halo)
        # avg_ref : (L, L)        kron(ones(Wp,Wp), eye(C)) channel reducer
        # o_ref   : (N, H, L)     last-layer output (halo columns stay 0)
        A = avg_ref[...]
        x = x_ref[...]                                   # padded slab, f32
        for layer in range(3):
            # ---- 3x3 conv: 3 banded matmuls accumulating in f32 ----
            acc = None
            for kh in range(3):
                patch = x[:, kh:kh + H, :].reshape(N * H, L)
                part = jnp.dot(patch, w_ref[layer * 3 + kh],
                               preferred_element_type=jnp.float32)
                acc = part if acc is None else acc + part
            # ---- bias + ReLU ----
            z = jnp.maximum(acc + b_ref[layer], 0.0)     # (N*H, L)
            # ---- BatchNorm2d, training batch stats, one pass ----
            s = jnp.concatenate(
                [jnp.sum(z, axis=0, keepdims=True),
                 jnp.sum(z * z, axis=0, keepdims=True)], axis=0)     # (2, L)
            # one small matmul does the reduce-over-W and the broadcast-back
            s = jnp.dot(s, A, preferred_element_type=jnp.float32)    # (2, L)
            mean = s[0:1] * inv_count
            var = s[1:2] * inv_count - mean * mean        # biased variance
            scale = g_ref[layer] * lax.rsqrt(var + BN_EPS)
            out = (z - mean) * scale + bt_ref[layer]      # halo lanes stay 0
            if layer < 2:
                # re-attach the zero halo rows for the next layer's conv
                zrow = jnp.zeros((N, 1, L), jnp.float32)
                x = jnp.concatenate(
                    [zrow, out.reshape(N, H, L), zrow], axis=1)
            else:
                o_ref[...] = out.reshape(N, H, L)

    return kernel


# --------------------------- host-side param prep ---------------------------
def _banded_conv_matrices(w_hwio, C, W):
    """(3,3,Cin,Cout) HWIO conv weight -> (3, (W+2)*C, (W+2)*C).

    Block [kh] maps an input row strip (pixel-major, channel-minor lanes, with
    a 1-pixel zero halo) to the output row strip in the same layout: the kw
    shifts and the channel contraction of the 3x3 conv are folded into a
    banded block matrix.  Halo output pixels and padded channels get all-zero
    columns, so the conv output keeps its zero halo automatically.
    """
    Cin, Cout = w_hwio.shape[2], w_hwio.shape[3]
    Wp = W + 2
    wp = jnp.zeros((3, 3, C, C), jnp.float32)
    wp = wp.at[:, :, :Cin, :Cout].set(w_hwio.astype(jnp.float32))
    p_out = jnp.arange(1, W + 1)                  # real output pixel positions
    blocks = []
    for kh in range(3):
        m = jnp.zeros((Wp * C, Wp * C), jnp.float32)
        for kw in range(3):
            sel = jnp.zeros((Wp, Wp), jnp.float32)
            sel = sel.at[p_out + kw - 1, p_out].set(1.0)   # p_in = p_out + kw - 1
            m = m + jnp.kron(sel, wp[kh, kw])
        blocks.append(m)
    return jnp.stack(blocks)                       # (3, Wp*C, Wp*C)


def _tile_channel_param(v, C, W):
    """(Cout,) per-channel param -> (1, (W+2)*C): tiled over real pixels, zero
    on halo pixels / padded channels (keeps the halo exactly 0 through
    bias / ReLU / BN)."""
    Cout = v.shape[0]
    Wp = W + 2
    vp = jnp.zeros((C,), jnp.float32).at[:Cout].set(v.astype(jnp.float32))
    strip = jnp.zeros((Wp, C), jnp.float32).at[1:W + 1, :].set(vp)
    return strip.reshape(1, Wp * C)


def triple_conv_block(x_nchw, params):
    """TripleConvBlock forward.  Input/output are NCHW like PyTorch."""
    N, Cin0, H, W = x_nchw.shape
    chans = [p["w"].shape[2] for p in params] + [p["w"].shape[3] for p in params]
    C = max(chans)                                 # working channel count
    Cout = params[-1]["w"].shape[3]
    Wp = W + 2
    L = Wp * C

    # One-time layout prep: NCHW -> padded, lane-dense row strip.
    x = jnp.transpose(x_nchw, (0, 2, 3, 1)).astype(jnp.float32)    # NHWC
    x = jnp.pad(x, ((0, 0), (0, 0), (0, 0), (0, C - Cin0)))         # pad channels
    x = x.reshape(N, H, W * C)
    x_strip = jnp.pad(x, ((0, 0), (1, 1), (C, C)))                  # (N, H+2, L)

    w_all = jnp.concatenate(
        [_banded_conv_matrices(p["w"], C, W) for p in params], axis=0)   # (9, L, L)
    b_all = jnp.stack([_tile_channel_param(p["b"], C, W) for p in params])
    g_all = jnp.stack([_tile_channel_param(p["gamma"], C, W) for p in params])
    bt_all = jnp.stack([_tile_channel_param(p["beta"], C, W) for p in params])
    avg = jnp.kron(jnp.ones((Wp, Wp), jnp.float32),
                   jnp.eye(C, dtype=jnp.float32))                        # (L, L)

    vmem = pl.BlockSpec(memory_space=pltpu.MemorySpace.VMEM)
    out = pl.pallas_call(
        _make_fused_kernel(N, H, W, C),
        out_shape=jax.ShapeDtypeStruct((N, H, L), jnp.float32),
        in_specs=[vmem] * 6,
        out_specs=vmem,
    )(x_strip, w_all, b_all, g_all, bt_all, avg)

    out = out.reshape(N, H, Wp, C)[:, :, 1:W + 1, :Cout]   # drop halo + pad chans
    return jnp.transpose(out, (0, 3, 1, 2))                # NHWC -> NCHW


# ---------------- pure-JAX reference (for correctness check) ----------------
def _ref_conv_block(x_nchw, w_hwio, b, gamma, beta):
    w_oihw = jnp.transpose(w_hwio, (3, 2, 0, 1))
    y = lax.conv_general_dilated(
        x_nchw, w_oihw, window_strides=(1, 1), padding="SAME",
        dimension_numbers=("NCHW", "OIHW", "NCHW"))
    y = y + b[None, :, None, None]
    y = jnp.maximum(y, 0.0)
    mean = jnp.mean(y, axis=(0, 2, 3), keepdims=True)
    var = jnp.mean(jnp.square(y - mean), axis=(0, 2, 3), keepdims=True)
    yn = (y - mean) * lax.rsqrt(var + BN_EPS)
    return gamma[None, :, None, None] * yn + beta[None, :, None, None]


def _ref_triple(x_nchw, params):
    x = x_nchw
    for p in params:
        x = _ref_conv_block(x, p["w"], p["b"], p["gamma"], p["beta"])
    return x


def _init_block_params(key, cin, cout):
    k1, k2, k3, k4 = jax.random.split(key, 4)
    return {
        # weight stored as HWIO: (3, 3, Cin, Cout)
        "w": 0.1 * jax.random.normal(k1, (3, 3, cin, cout), jnp.float32),
        "b": 0.05 * jax.random.normal(k2, (cout,), jnp.float32),
        "gamma": 1.0 + 0.1 * jax.random.normal(k3, (cout,), jnp.float32),
        "beta": 0.05 * jax.random.normal(k4, (cout,), jnp.float32),
    }


if __name__ == "__main__":
    key = jax.random.PRNGKey(0)
    kx, kp0, kp1, kp2 = jax.random.split(key, 4)

    N, Cin, Cout, H, W = 2, 4, 8, 16, 16
    x = jax.random.normal(kx, (N, Cin, H, W), jnp.float32)   # NCHW like PyTorch

    params = [
        _init_block_params(kp0, Cin, Cout),
        _init_block_params(kp1, Cout, Cout),
        _init_block_params(kp2, Cout, Cout),
    ]

    fused = jax.jit(triple_conv_block)
    out = jax.block_until_ready(fused(x, params))
    ref = jax.block_until_ready(_ref_triple(x, params))

    assert out.shape == (N, Cout, H, W), out.shape
    assert jnp.allclose(out, ref, rtol=1e-3, atol=1e-3), (
        float(jnp.max(jnp.abs(out - ref))))
    print("KERNEL_OK")
</pallas_src>

<mosaic_0001>
module attributes {stable_mosaic.version = 11 : i64} {
  func.func @kernel(%arg0: memref<2x18x144xf32, #tpu.memory_space<vmem>>, %arg1: memref<9x144x144xf32, #tpu.memory_space<vmem>>, %arg2: memref<3x1x144xf32, #tpu.memory_space<vmem>>, %arg3: memref<3x1x144xf32, #tpu.memory_space<vmem>>, %arg4: memref<3x1x144xf32, #tpu.memory_space<vmem>>, %arg5: memref<144x144xf32, #tpu.memory_space<vmem>>, %arg6: memref<2x16x144xf32, #tpu.memory_space<vmem>>) attributes {dimension_semantics = [], scalar_prefetch = 0 : i64, scratch_operands = 0 : i64, tpu.core_type = #tpu.core_type<tc>} {
    %c0 = arith.constant 0 : index
    %c0_0 = arith.constant 0 : index
    %0 = vector.load %arg5[%c0, %c0_0] : memref<144x144xf32, #tpu.memory_space<vmem>>, vector<144x144xf32>
    %c0_1 = arith.constant 0 : index
    %c0_2 = arith.constant 0 : index
    %c0_3 = arith.constant 0 : index
    %1 = vector.load %arg0[%c0_1, %c0_2, %c0_3] : memref<2x18x144xf32, #tpu.memory_space<vmem>>, vector<2x18x144xf32>
    %2 = vector.extract_strided_slice %1 {offsets = [0, 0, 0], sizes = [2, 16, 144], strides = [1, 1, 1]} : vector<2x18x144xf32> to vector<2x16x144xf32>
    %3 = vector.shape_cast %2 : vector<2x16x144xf32> to vector<32x144xf32>
    %c0_4 = arith.constant 0 : index
    %c0_5 = arith.constant 0 : index
    %c0_6 = arith.constant 0 : index
    %4 = vector.load %arg1[%c0_4, %c0_5, %c0_6] : memref<9x144x144xf32, #tpu.memory_space<vmem>>, vector<1x144x144xf32>
    %5 = vector.shape_cast %4 : vector<1x144x144xf32> to vector<144x144xf32>
    %cst = arith.constant dense<0.000000e+00> : vector<32x144xf32>
    %6 = tpu.matmul %3, %5, %cst {dimension_numbers = #tpu.dot_dimension_numbers<[1], [0], [0], [1], [0, 0, 1, 1], [], []>} : vector<32x144xf32>, vector<144x144xf32>, vector<32x144xf32> -> vector<32x144xf32>
    %7 = vector.extract_strided_slice %1 {offsets = [0, 1, 0], sizes = [2, 16, 144], strides = [1, 1, 1]} : vector<2x18x144xf32> to vector<2x16x144xf32>
    %8 = vector.shape_cast %7 : vector<2x16x144xf32> to vector<32x144xf32>
    %c1 = arith.constant 1 : index
    %c0_7 = arith.constant 0 : index
    %c0_8 = arith.constant 0 : index
    %9 = vector.load %arg1[%c1, %c0_7, %c0_8] : memref<9x144x144xf32, #tpu.memory_space<vmem>>, vector<1x144x144xf32>
    %10 = vector.shape_cast %9 : vector<1x144x144xf32> to vector<144x144xf32>
    %cst_9 = arith.constant dense<0.000000e+00> : vector<32x144xf32>
    %11 = tpu.matmul %8, %10, %cst_9 {dimension_numbers = #tpu.dot_dimension_numbers<[1], [0], [0], [1], [0, 0, 1, 1], [], []>} : vector<32x144xf32>, vector<144x144xf32>, vector<32x144xf32> -> vector<32x144xf32>
    %12 = arith.addf %6, %11 : vector<32x144xf32>
    %13 = vector.extract_strided_slice %1 {offsets = [0, 2, 0], sizes = [2, 16, 144], strides = [1, 1, 1]} : vector<2x18x144xf32> to vector<2x16x144xf32>
    %14 = vector.shape_cast %13 : vector<2x16x144xf32> to vector<32x144xf32>
    %c2 = arith.constant 2 : index
    %c0_10 = arith.constant 0 : index
    %c0_11 = arith.constant 0 : index
    %15 = vector.load %arg1[%c2, %c0_10, %c0_11] : memref<9x144x144xf32, #tpu.memory_space<vmem>>, vector<1x144x144xf32>
    %16 = vector.shape_cast %15 : vector<1x144x144xf32> to vector<144x144xf32>
    %cst_12 = arith.constant dense<0.000000e+00> : vector<32x144xf32>
    %17 = tpu.matmul %14, %16, %cst_12 {dimension_numbers = #tpu.dot_dimension_numbers<[1], [0], [0], [1], [0, 0, 1, 1], [], []>} : vector<32x144xf32>, vector<144x144xf32>, vector<32x144xf32> -> vector<32x144xf32>
    %18 = arith.addf %12, %17 : vector<32x144xf32>
    %c0_13 = arith.constant 0 : index
    %c0_14 = arith.constant 0 : index
    %c0_15 = arith.constant 0 : index
    %19 = vector.load %arg2[%c0_13, %c0_14, %c0_15] : memref<3x1x144xf32, #tpu.memory_space<vmem>>, vector<1x1x144xf32>
    %20 = vector.shape_cast %19 : vector<1x1x144xf32> to vector<1x144xf32>
    %21 = vector.broadcast %20 : vector<1x144xf32> to vector<32x144xf32>
    %22 = arith.addf %18, %21 : vector<32x144xf32>
    %cst_16 = arith.constant 0.000000e+00 : f32
    %23 = vector.broadcast %cst_16 : f32 to vector<32x144xf32>
    %24 = arith.maximumf %22, %23 : vector<32x144xf32>
    %cst_17 = arith.constant dense<0.000000e+00> : vector<144xf32>
    %25 = vector.multi_reduction <add>, %24, %cst_17 [0] : vector<32x144xf32> to vector<144xf32>
    %26 = vector.shape_cast %25 : vector<144xf32> to vector<1x144xf32>
    %27 = arith.mulf %24, %24 : vector<32x144xf32>
    %cst_18 = arith.constant dense<0.000000e+00> : vector<144xf32>
    %28 = vector.multi_reduction <add>, %27, %cst_18 [0] : vector<32x144xf32> to vector<144xf32>
    %29 = vector.shape_cast %28 : vector<144xf32> to vector<1x144xf32>
    %30 = tpu.concatenate %26, %29 in 0 : vector<1x144xf32>, vector<1x144xf32> -> vector<2x144xf32>
    %cst_19 = arith.constant dense<0.000000e+00> : vector<2x144xf32>
    %31 = tpu.matmul %30, %0, %cst_19 {dimension_numbers = #tpu.dot_dimension_numbers<[1], [0], [0], [1], [0, 0, 1, 1], [], []>} : vector<2x144xf32>, vector<144x144xf32>, vector<2x144xf32> -> vector<2x144xf32>
    %32 = vector.extract_strided_slice %31 {offsets = [0, 0], sizes = [1, 144], strides = [1, 1]} : vector<2x144xf32> to vector<1x144xf32>
    %cst_20 = arith.constant 0.001953125 : f32
    %33 = vector.broadcast %cst_20 : f32 to vector<1x144xf32>
    %34 = arith.mulf %32, %33 : vector<1x144xf32>
    %35 = vector.extract_strided_slice %31 {offsets = [1, 0], sizes = [1, 144], strides = [1, 1]} : vector<2x144xf32> to vector<1x144xf32>
    %cst_21 = arith.constant 0.001953125 : f32
    %36 = vector.broadcast %cst_21 : f32 to vector<1x144xf32>
    %37 = arith.mulf %35, %36 : vector<1x144xf32>
    %38 = arith.mulf %34, %34 : vector<1x144xf32>
    %39 = arith.subf %37, %38 : vector<1x144xf32>
    %c0_22 = arith.constant 0 : index
    %c0_23 = arith.constant 0 : index
    %c0_24 = arith.constant 0 : index
    %40 = vector.load %arg3[%c0_22, %c0_23, %c0_24] : memref<3x1x144xf32, #tpu.memory_space<vmem>>, vector<1x1x144xf32>
    %41 = vector.shape_cast %40 : vector<1x1x144xf32> to vector<1x144xf32>
    %cst_25 = arith.constant 9.99999974E-6 : f32
    %42 = vector.broadcast %cst_25 : f32 to vector<1x144xf32>
    %43 = arith.addf %39, %42 : vector<1x144xf32>
    %44 = math.rsqrt %43 : vector<1x144xf32>
    %45 = arith.mulf %41, %44 : vector<1x144xf32>
    %46 = vector.broadcast %34 : vector<1x144xf32> to vector<32x144xf32>
    %47 = arith.subf %24, %46 : vector<32x144xf32>
    %48 = vector.broadcast %45 : vector<1x144xf32> to vector<32x144xf32>
    %49 = arith.mulf %47, %48 : vector<32x144xf32>
    %c0_26 = arith.constant 0 : index
    %c0_27 = arith.constant 0 : index
    %c0_28 = arith.constant 0 : index
    %50 = vector.load %arg4[%c0_26, %c0_27, %c0_28] : memref<3x1x144xf32, #tpu.memory_space<vmem>>, vector<1x1x144xf32>
    %51 = vector.shape_cast %50 : vector<1x1x144xf32> to vector<1x144xf32>
    %52 = vector.broadcast %51 : vector<1x144xf32> to vector<32x144xf32>
    %53 = arith.addf %49, %52 : vector<32x144xf32>
    %cst_29 = arith.constant 0.000000e+00 : f32
    %54 = vector.broadcast %cst_29 : f32 to vector<2x1x144xf32>
    %55 = vector.shape_cast %53 : vector<32x144xf32> to vector<2x16x144xf32>
    %56 = tpu.concatenate %54, %55, %54 in 1 : vector<2x1x144xf32>, vector<2x16x144xf32>, vector<2x1x144xf32> -> vector<2x18x144xf32>
    %57 = vector.extract_strided_slice %56 {offsets = [0, 0, 0], sizes = [2, 16, 144], strides = [1, 1, 1]} : vector<2x18x144xf32> to vector<2x16x144xf32>
    %58 = vector.shape_cast %57 : vector<2x16x144xf32> to vector<32x144xf32>
    %c3 = arith.constant 3 : index
    %c0_30 = arith.constant 0 : index
    %c0_31 = arith.constant 0 : index
    %59 = vector.load %arg1[%c3, %c0_30, %c0_31] : memref<9x144x144xf32, #tpu.memory_space<vmem>>, vector<1x144x144xf32>
    %60 = vector.shape_cast %59 : vector<1x144x144xf32> to vector<144x144xf32>
    %cst_32 = arith.constant dense<0.000000e+00> : vector<32x144xf32>
    %61 = tpu.matmul %58, %60, %cst_32 {dimension_numbers = #tpu.dot_dimension_numbers<[1], [0], [0], [1], [0, 0, 1, 1], [], []>} : vector<32x144xf32>, vector<144x144xf32>, vector<32x144xf32> -> vector<32x144xf32>
    %62 = vector.extract_strided_slice %56 {offsets = [0, 1, 0], sizes = [2, 16, 144], strides = [1, 1, 1]} : vector<2x18x144xf32> to vector<2x16x144xf32>
    %63 = vector.shape_cast %62 : vector<2x16x144xf32> to vector<32x144xf32>
    %c4 = arith.constant 4 : index
    %c0_33 = arith.constant 0 : index
    %c0_34 = arith.constant 0 : index
    %64 = vector.load %arg1[%c4, %c0_33, %c0_34] : memref<9x144x144xf32, #tpu.memory_space<vmem>>, vector<1x144x144xf32>
    %65 = vector.shape_cast %64 : vector<1x144x144xf32> to vector<144x144xf32>
    %cst_35 = arith.constant dense<0.000000e+00> : vector<32x144xf32>
    %66 = tpu.matmul %63, %65, %cst_35 {dimension_numbers = #tpu.dot_dimension_numbers<[1], [0], [0], [1], [0, 0, 1, 1], [], []>} : vector<32x144xf32>, vector<144x144xf32>, vector<32x144xf32> -> vector<32x144xf32>
    %67 = arith.addf %61, %66 : vector<32x144xf32>
    %68 = vector.extract_strided_slice %56 {offsets = [0, 2, 0], sizes = [2, 16, 144], strides = [1, 1, 1]} : vector<2x18x144xf32> to vector<2x16x144xf32>
    %69 = vector.shape_cast %68 : vector<2x16x144xf32> to vector<32x144xf32>
    %c5 = arith.constant 5 : index
    %c0_36 = arith.constant 0 : index
    %c0_37 = arith.constant 0 : index
    %70 = vector.load %arg1[%c5, %c0_36, %c0_37] : memref<9x144x144xf32, #tpu.memory_space<vmem>>, vector<1x144x144xf32>
    %71 = vector.shape_cast %70 : vector<1x144x144xf32> to vector<144x144xf32>
    %cst_38 = arith.constant dense<0.000000e+00> : vector<32x144xf32>
    %72 = tpu.matmul %69, %71, %cst_38 {dimension_numbers = #tpu.dot_dimension_numbers<[1], [0], [0], [1], [0, 0, 1, 1], [], []>} : vector<32x144xf32>, vector<144x144xf32>, vector<32x144xf32> -> vector<32x144xf32>
    %73 = arith.addf %67, %72 : vector<32x144xf32>
    %c1_39 = arith.constant 1 : index
    %c0_40 = arith.constant 0 : index
    %c0_41 = arith.constant 0 : index
    %74 = vector.load %arg2[%c1_39, %c0_40, %c0_41] : memref<3x1x144xf32, #tpu.memory_space<vmem>>, vector<1x1x144xf32>
    %75 = vector.shape_cast %74 : vector<1x1x144xf32> to vector<1x144xf32>
    %76 = vector.broadcast %75 : vector<1x144xf32> to vector<32x144xf32>
    %77 = arith.addf %73, %76 : vector<32x144xf32>
    %cst_42 = arith.constant 0.000000e+00 : f32
    %78 = vector.broadcast %cst_42 : f32 to vector<32x144xf32>
    %79 = arith.maximumf %77, %78 : vector<32x144xf32>
    %cst_43 = arith.constant dense<0.000000e+00> : vector<144xf32>
    %80 = vector.multi_reduction <add>, %79, %cst_43 [0] : vector<32x144xf32> to vector<144xf32>
    %81 = vector.shape_cast %80 : vector<144xf32> to vector<1x144xf32>
    %82 = arith.mulf %79, %79 : vector<32x144xf32>
    %cst_44 = arith.constant dense<0.000000e+00> : vector<144xf32>
    %83 = vector.multi_reduction <add>, %82, %cst_44 [0] : vector<32x144xf32> to vector<144xf32>
    %84 = vector.shape_cast %83 : vector<144xf32> to vector<1x144xf32>
    %85 = tpu.concatenate %81, %84 in 0 : vector<1x144xf32>, vector<1x144xf32> -> vector<2x144xf32>
    %cst_45 = arith.constant dense<0.000000e+00> : vector<2x144xf32>
    %86 = tpu.matmul %85, %0, %cst_45 {dimension_numbers = #tpu.dot_dimension_numbers<[1], [0], [0], [1], [0, 0, 1, 1], [], []>} : vector<2x144xf32>, vector<144x144xf32>, vector<2x144xf32> -> vector<2x144xf32>
    %87 = vector.extract_strided_slice %86 {offsets = [0, 0], sizes = [1, 144], strides = [1, 1]} : vector<2x144xf32> to vector<1x144xf32>
    %cst_46 = arith.constant 0.001953125 : f32
    %88 = vector.broadcast %cst_46 : f32 to vector<1x144xf32>
    %89 = arith.mulf %87, %88 : vector<1x144xf32>
    %90 = vector.extract_strided_slice %86 {offsets = [1, 0], sizes = [1, 144], strides = [1, 1]} : vector<2x144xf32> to vector<1x144xf32>
    %cst_47 = arith.constant 0.001953125 : f32
    %91 = vector.broadcast %cst_47 : f32 to vector<1x144xf32>
    %92 = arith.mulf %90, %91 : vector<1x144xf32>
    %93 = arith.mulf %89, %89 : vector<1x144xf32>
    %94 = arith.subf %92, %93 : vector<1x144xf32>
    %c1_48 = arith.constant 1 : index
    %c0_49 = arith.constant 0 : index
    %c0_50 = arith.constant 0 : index
    %95 = vector.load %arg3[%c1_48, %c0_49, %c0_50] : memref<3x1x144xf32, #tpu.memory_space<vmem>>, vector<1x1x144xf32>
    %96 = vector.shape_cast %95 : vector<1x1x144xf32> to vector<1x144xf32>
    %cst_51 = arith.constant 9.99999974E-6 : f32
    %97 = vector.broadcast %cst_51 : f32 to vector<1x144xf32>
    %98 = arith.addf %94, %97 : vector<1x144xf32>
    %99 = math.rsqrt %98 : vector<1x144xf32>
    %100 = arith.mulf %96, %99 : vector<1x144xf32>
    %101 = vector.broadcast %89 : vector<1x144xf32> to vector<32x144xf32>
    %102 = arith.subf %79, %101 : vector<32x144xf32>
    %103 = vector.broadcast %100 : vector<1x144xf32> to vector<32x144xf32>
    %104 = arith.mulf %102, %103 : vector<32x144xf32>
    %c1_52 = arith.constant 1 : index
    %c0_53 = arith.constant 0 : index
    %c0_54 = arith.constant 0 : index
    %105 = vector.load %arg4[%c1_52, %c0_53, %c0_54] : memref<3x1x144xf32, #tpu.memory_space<vmem>>, vector<1x1x144xf32>
    %106 = vector.shape_cast %105 : vector<1x1x144xf32> to vector<1x144xf32>
    %107 = vector.broadcast %106 : vector<1x144xf32> to vector<32x144xf32>
    %108 = arith.addf %104, %107 : vector<32x144xf32>
    %cst_55 = arith.constant 0.000000e+00 : f32
    %109 = vector.broadcast %cst_55 : f32 to vector<2x1x144xf32>
    %110 = vector.shape_cast %108 : vector<32x144xf32> to vector<2x16x144xf32>
    %111 = tpu.concatenate %109, %110, %109 in 1 : vector<2x1x144xf32>, vector<2x16x144xf32>, vector<2x1x144xf32> -> vector<2x18x144xf32>
    %112 = vector.extract_strided_slice %111 {offsets = [0, 0, 0], sizes = [2, 16, 144], strides = [1, 1, 1]} : vector<2x18x144xf32> to vector<2x16x144xf32>
    %113 = vector.shape_cast %112 : vector<2x16x144xf32> to vector<32x144xf32>
    %c6 = arith.constant 6 : index
    %c0_56 = arith.constant 0 : index
    %c0_57 = arith.constant 0 : index
    %114 = vector.load %arg1[%c6, %c0_56, %c0_57] : memref<9x144x144xf32, #tpu.memory_space<vmem>>, vector<1x144x144xf32>
    %115 = vector.shape_cast %114 : vector<1x144x144xf32> to vector<144x144xf32>
    %cst_58 = arith.constant dense<0.000000e+00> : vector<32x144xf32>
    %116 = tpu.matmul %113, %115, %cst_58 {dimension_numbers = #tpu.dot_dimension_numbers<[1], [0], [0], [1], [0, 0, 1, 1], [], []>} : vector<32x144xf32>, vector<144x144xf32>, vector<32x144xf32> -> vector<32x144xf32>
    %117 = vector.extract_strided_slice %111 {offsets = [0, 1, 0], sizes = [2, 16, 144], strides = [1, 1, 1]} : vector<2x18x144xf32> to vector<2x16x144xf32>
    %118 = vector.shape_cast %117 : vector<2x16x144xf32> to vector<32x144xf32>
    %c7 = arith.constant 7 : index
    %c0_59 = arith.constant 0 : index
    %c0_60 = arith.constant 0 : index
    %119 = vector.load %arg1[%c7, %c0_59, %c0_60] : memref<9x144x144xf32, #tpu.memory_space<vmem>>, vector<1x144x144xf32>
    %120 = vector.shape_cast %119 : vector<1x144x144xf32> to vector<144x144xf32>
    %cst_61 = arith.constant dense<0.000000e+00> : vector<32x144xf32>
    %121 = tpu.matmul %118, %120, %cst_61 {dimension_numbers = #tpu.dot_dimension_numbers<[1], [0], [0], [1], [0, 0, 1, 1], [], []>} : vector<32x144xf32>, vector<144x144xf32>, vector<32x144xf32> -> vector<32x144xf32>
    %122 = arith.addf %116, %121 : vector<32x144xf32>
    %123 = vector.extract_strided_slice %111 {offsets = [0, 2, 0], sizes = [2, 16, 144], strides = [1, 1, 1]} : vector<2x18x144xf32> to vector<2x16x144xf32>
    %124 = vector.shape_cast %123 : vector<2x16x144xf32> to vector<32x144xf32>
    %c8 = arith.constant 8 : index
    %c0_62 = arith.constant 0 : index
    %c0_63 = arith.constant 0 : index
    %125 = vector.load %arg1[%c8, %c0_62, %c0_63] : memref<9x144x144xf32, #tpu.memory_space<vmem>>, vector<1x144x144xf32>
    %126 = vector.shape_cast %125 : vector<1x144x144xf32> to vector<144x144xf32>
    %cst_64 = arith.constant dense<0.000000e+00> : vector<32x144xf32>
    %127 = tpu.matmul %124, %126, %cst_64 {dimension_numbers = #tpu.dot_dimension_numbers<[1], [0], [0], [1], [0, 0, 1, 1], [], []>} : vector<32x144xf32>, vector<144x144xf32>, vector<32x144xf32> -> vector<32x144xf32>
    %128 = arith.addf %122, %127 : vector<32x144xf32>
    %c2_65 = arith.constant 2 : index
    %c0_66 = arith.constant 0 : index
    %c0_67 = arith.constant 0 : index
    %129 = vector.load %arg2[%c2_65, %c0_66, %c0_67] : memref<3x1x144xf32, #tpu.memory_space<vmem>>, vector<1x1x144xf32>
    %130 = vector.shape_cast %129 : vector<1x1x144xf32> to vector<1x144xf32>
    %131 = vector.broadcast %130 : vector<1x144xf32> to vector<32x144xf32>
    %132 = arith.addf %128, %131 : vector<32x144xf32>
    %cst_68 = arith.constant 0.000000e+00 : f32
    %133 = vector.broadcast %cst_68 : f32 to vector<32x144xf32>
    %134 = arith.maximumf %132, %133 : vector<32x144xf32>
    %cst_69 = arith.constant dense<0.000000e+00> : vector<144xf32>
    %135 = vector.multi_reduction <add>, %134, %cst_69 [0] : vector<32x144xf32> to vector<144xf32>
    %136 = vector.shape_cast %135 : vector<144xf32> to vector<1x144xf32>
    %137 = arith.mulf %134, %134 : vector<32x144xf32>
    %cst_70 = arith.constant dense<0.000000e+00> : vector<144xf32>
    %138 = vector.multi_reduction <add>, %137, %cst_70 [0] : vector<32x144xf32> to vector<144xf32>
    %139 = vector.shape_cast %138 : vector<144xf32> to vector<1x144xf32>
    %140 = tpu.concatenate %136, %139 in 0 : vector<1x144xf32>, vector<1x144xf32> -> vector<2x144xf32>
    %cst_71 = arith.constant dense<0.000000e+00> : vector<2x144xf32>
    %141 = tpu.matmul %140, %0, %cst_71 {dimension_numbers = #tpu.dot_dimension_numbers<[1], [0], [0], [1], [0, 0, 1, 1], [], []>} : vector<2x144xf32>, vector<144x144xf32>, vector<2x144xf32> -> vector<2x144xf32>
    %142 = vector.extract_strided_slice %141 {offsets = [0, 0], sizes = [1, 144], strides = [1, 1]} : vector<2x144xf32> to vector<1x144xf32>
    %cst_72 = arith.constant 0.001953125 : f32
    %143 = vector.broadcast %cst_72 : f32 to vector<1x144xf32>
    %144 = arith.mulf %142, %143 : vector<1x144xf32>
    %145 = vector.extract_strided_slice %141 {offsets = [1, 0], sizes = [1, 144], strides = [1, 1]} : vector<2x144xf32> to vector<1x144xf32>
    %cst_73 = arith.constant 0.001953125 : f32
    %146 = vector.broadcast %cst_73 : f32 to vector<1x144xf32>
    %147 = arith.mulf %145, %146 : vector<1x144xf32>
    %148 = arith.mulf %144, %144 : vector<1x144xf32>
    %149 = arith.subf %147, %148 : vector<1x144xf32>
    %c2_74 = arith.constant 2 : index
    %c0_75 = arith.constant 0 : index
    %c0_76 = arith.constant 0 : index
    %150 = vector.load %arg3[%c2_74, %c0_75, %c0_76] : memref<3x1x144xf32, #tpu.memory_space<vmem>>, vector<1x1x144xf32>
    %151 = vector.shape_cast %150 : vector<1x1x144xf32> to vector<1x144xf32>
    %cst_77 = arith.constant 9.99999974E-6 : f32
    %152 = vector.broadcast %cst_77 : f32 to vector<1x144xf32>
    %153 = arith.addf %149, %152 : vector<1x144xf32>
    %154 = math.rsqrt %153 : vector<1x144xf32>
    %155 = arith.mulf %151, %154 : vector<1x144xf32>
    %156 = vector.broadcast %144 : vector<1x144xf32> to vector<32x144xf32>
    %157 = arith.subf %134, %156 : vector<32x144xf32>
    %158 = vector.broadcast %155 : vector<1x144xf32> to vector<32x144xf32>
    %159 = arith.mulf %157, %158 : vector<32x144xf32>
    %c2_78 = arith.constant 2 : index
    %c0_79 = arith.constant 0 : index
    %c0_80 = arith.constant 0 : index
    %160 = vector.load %arg4[%c2_78, %c0_79, %c0_80] : memref<3x1x144xf32, #tpu.memory_space<vmem>>, vector<1x1x144xf32>
    %161 = vector.shape_cast %160 : vector<1x1x144xf32> to vector<1x144xf32>
    %162 = vector.broadcast %161 : vector<1x144xf32> to vector<32x144xf32>
    %163 = arith.addf %159, %162 : vector<32x144xf32>
    %164 = vector.shape_cast %163 : vector<32x144xf32> to vector<2x16x144xf32>
    %c0_81 = arith.constant 0 : index
    %c0_82 = arith.constant 0 : index
    %c0_83 = arith.constant 0 : index
    %165 = vector.load %arg6[%c0_81, %c0_82, %c0_83] : memref<2x16x144xf32, #tpu.memory_space<vmem>>, vector<2x16x144xf32>
    tpu.vector_store %arg6[%c0_81, %c0_82, %c0_83], %164 {strides = array<i32>} : memref<2x16x144xf32, #tpu.memory_space<vmem>>, vector<2x16x144xf32>,
    return
  }
}

</mosaic_0001>

<llo_original>
// kernel: triple_conv_block.1
$region0: #{triple_conv_block.1}
  #allocation0 [shape = 'u32[]', space=smem, size = 0x4, offset = 0x4, fixed_abs, tag = 'smem constant byte address 0x4 - core index']
  #allocation1 [shape = 'u32[144,128]{1,0:T(1,128)}', space=vmem, size = 0x12000, scoped, tag = 'internal scratch']
  %s0 = inlined_call_operand.vmem [shape: f32[2,18,144], index: 0, kind: input, shape index: {}]
  %s1 = inlined_call_operand.vmem [shape: f32[9,144,144], index: 1, kind: input, shape index: {}]
  %s2 = inlined_call_operand.vmem [shape: f32[3,1,144], index: 2, kind: input, shape index: {}]
  %s3 = inlined_call_operand.vmem [shape: f32[3,1,144], index: 3, kind: input, shape index: {}]
  %s4 = inlined_call_operand.vmem [shape: f32[3,1,144], index: 4, kind: input, shape index: {}]
  %s5 = inlined_call_operand.vmem [shape: f32[144,144], index: 5, kind: input, shape index: {}]
  %s6 = inlined_call_operand.vmem [shape: f32[2,16,144], index: 6, kind: output, shape index: {}]
  %s7 = sld [smem:[#allocation0]]
  $region34: #{triple_conv_block.1} parent=0
    _
  %s9 = ssub.s32 1, %s7
  %s10 = scalar_select 0, %s9, %s7
  // Predicated region
  $region2: #{triple_conv_block.1} parent=0 // pred_check
    _
  $region3: #{triple_conv_block.1} parent=0 // pred_check_branch
    %12 = sbr.rel (0) target = $region5
  $region4: #{triple_conv_block.1} parent=0 // pred_region
    _
  $region5: #{triple_conv_block.1} parent=0 // pred_fallthru
    _
  // Predicated region
  $region6: #{triple_conv_block.1} parent=0 // pred_check
    _
  $region7: #{triple_conv_block.1} parent=0 // pred_check_branch
    %14 = sbr.rel (0) target = $region9
  $region8: #{triple_conv_block.1} parent=0 // pred_region
    _
  $region9: #{triple_conv_block.1} parent=0 // pred_fallthru
    _
  // Predicated region
  $region10: #{triple_conv_block.1} parent=0 // pred_check
    _
  $region11: #{triple_conv_block.1} parent=0 // pred_check_branch
    %16 = sbr.rel (0) target = $region13
  $region12: #{triple_conv_block.1} parent=0 // pred_region
    _
  $region13: #{triple_conv_block.1} parent=0 // pred_fallthru
    _
  // Predicated region
  $region14: #{triple_conv_block.1} parent=0 // pred_check
    _
  $region15: #{triple_conv_block.1} parent=0 // pred_check_branch
    %18 = sbr.rel (0) target = $region17
  $region16: #{triple_conv_block.1} parent=0 // pred_region
    _
  $region17: #{triple_conv_block.1} parent=0 // pred_fallthru
    _
  // Predicated region
  $region18: #{triple_conv_block.1} parent=0 // pred_check
    _
  $region19: #{triple_conv_block.1} parent=0 // pred_check_branch
    %20 = sbr.rel (0) target = $region21
  $region20: #{triple_conv_block.1} parent=0 // pred_region
    _
  $region21: #{triple_conv_block.1} parent=0 // pred_fallthru
    _
  // Predicated region
  $region22: #{triple_conv_block.1} parent=0 // pred_check
    _
  $region23: #{triple_conv_block.1} parent=0 // pred_check_branch
    %22 = sbr.rel (0) target = $region25
  $region24: #{triple_conv_block.1} parent=0 // pred_region
    _
  $region25: #{triple_conv_block.1} parent=0 // pred_fallthru
    _
  %v23 = vld [vmem:[%s5] sm:$0xff]
  %v24 = vld [vmem:[%s5 + $0x8] sm:$0xff]
  %v25 = vld [vmem:[%s5 + $0x10] sm:$0xff]
  %v26 = vld [vmem:[%s5 + $0x18] sm:$0xff]
  %v27 = vld [vmem:[%s5 + $0x20] sm:$0xff]
  %v28 = vld [vmem:[%s5 + $0x28] sm:$0xff]
  %v29 = vld [vmem:[%s5 + $0x30] sm:$0xff]
  %v30 = vld [vmem:[%s5 + $0x38] sm:$0xff]
  %v31 = vld [vmem:[%s5 + $0x40] sm:$0xff]
  %v32 = vld [vmem:[%s5 + $0x48] sm:$0xff]
  %v33 = vld [vmem:[%s5 + $0x50] sm:$0xff]
  %v34 = vld [vmem:[%s5 + $0x58] sm:$0xff]
  %v35 = vld [vmem:[%s5 + $0x60] sm:$0xff]
  %v36 = vld [vmem:[%s5 + $0x68] sm:$0xff]
  %v37 = vld [vmem:[%s5 + $0x70] sm:$0xff]
  %v38 = vld [vmem:[%s5 + $0x78] sm:$0xff]
  %v39 = vld [vmem:[%s5 + $0x80] sm:$0xff]
  %v40 = vld [vmem:[%s5 + $0x88] sm:$0xff]
  %v41 = vld [vmem:[%s5 + $0x90] sm:$0xff]
  %v42 = vld [vmem:[%s5 + $0x98] sm:$0xff]
  %v43 = vld [vmem:[%s5 + $0xa0] sm:$0xff]
  %v44 = vld [vmem:[%s5 + $0xa8] sm:$0xff]
  %v45 = vld [vmem:[%s5 + $0xb0] sm:$0xff]
  %v46 = vld [vmem:[%s5 + $0xb8] sm:$0xff]
  %v47 = vld [vmem:[%s5 + $0xc0] sm:$0xff]
  %v48 = vld [vmem:[%s5 + $0xc8] sm:$0xff]
  %v49 = vld [vmem:[%s5 + $0xd0] sm:$0xff]
  %v50 = vld [vmem:[%s5 + $0xd8] sm:$0xff]
  %v51 = vld [vmem:[%s5 + $0xe0] sm:$0xff]
  %v52 = vld [vmem:[%s5 + $0xe8] sm:$0xff]
  %v53 = vld [vmem:[%s5 + $0xf0] sm:$0xff]
  %v54 = vld [vmem:[%s5 + $0xf8] sm:$0xff]
  %v55 = vld [vmem:[%s5 + $0x100] sm:$0xff]
  %v56 = vld [vmem:[%s5 + $0x108] sm:$0xff]
  %v57 = vld [vmem:[%s5 + $0x110] sm:$0xff]
  %v58 = vld [vmem:[%s5 + $0x118] sm:$0xff]
  %v59 = vld [vmem:[%s0] sm:$0xff]
  %v60 = vld [vmem:[%s0 + $0x8] sm:$0xff]
  %v61 = vld [vmem:[%s0 + $0x10] sm:$0xff]
  %v62 = vld [vmem:[%s0 + $0x18] sm:$0xff]
  %v63 = vld [vmem:[%s0 + $0x20] sm:$0x3]
  %v64 = vld [vmem:[%s0 + $0x28] sm:$0x3]
  %v65 = vld [vmem:[%s0 + $0x30] sm:$0xff]
  %v66 = vld [vmem:[%s0 + $0x38] sm:$0xff]
  %v67 = vld [vmem:[%s0 + $0x40] sm:$0xff]
  %v68 = vld [vmem:[%s0 + $0x48] sm:$0xff]
  %v69 = vld [vmem:[%s0 + $0x50] sm:$0x3]
  %v70 = vld [vmem:[%s0 + $0x58] sm:$0x3]
  %v71 = vld [vmem:[%s1] sm:$0xff]
  %v72 = vld [vmem:[%s1 + $0x8] sm:$0xff]
  %v73 = vld [vmem:[%s1 + $0x10] sm:$0xff]
  %v74 = vld [vmem:[%s1 + $0x18] sm:$0xff]
  %v75 = vld [vmem:[%s1 + $0x20] sm:$0xff]
  %v76 = vld [vmem:[%s1 + $0x28] sm:$0xff]
  %v77 = vld [vmem:[%s1 + $0x30] sm:$0xff]
  %v78 = vld [vmem:[%s1 + $0x38] sm:$0xff]
  %v79 = vld [vmem:[%s1 + $0x40] sm:$0xff]
  %v80 = vld [vmem:[%s1 + $0x48] sm:$0xff]
  %v81 = vld [vmem:[%s1 + $0x50] sm:$0xff]
  %v82 = vld [vmem:[%s1 + $0x58] sm:$0xff]
  %v83 = vld [vmem:[%s1 + $0x60] sm:$0xff]
  %v84 = vld [vmem:[%s1 + $0x68] sm:$0xff]
  %v85 = vld [vmem:[%s1 + $0x70] sm:$0xff]
  %v86 = vld [vmem:[%s1 + $0x78] sm:$0xff]
  %v87 = vld [vmem:[%s1 + $0x80] sm:$0xff]
  %v88 = vld [vmem:[%s1 + $0x88] sm:$0xff]
  %v89 = vld [vmem:[%s1 + $0x90] sm:$0xff]
  %v90 = vld [vmem:[%s1 + $0x98] sm:$0xff]
  %v91 = vld [vmem:[%s1 + $0xa0] sm:$0xff]
  %v92 = vld [vmem:[%s1 + $0xa8] sm:$0xff]
  %v93 = vld [vmem:[%s1 + $0xb0] sm:$0xff]
  %v94 = vld [vmem:[%s1 + $0xb8] sm:$0xff]
  %v95 = vld [vmem:[%s1 + $0xc0] sm:$0xff]
  %v96 = vld [vmem:[%s1 + $0xc8] sm:$0xff]
  %v97 = vld [vmem:[%s1 + $0xd0] sm:$0xff]
  %v98 = vld [vmem:[%s1 + $0xd8] sm:$0xff]
  %v99 = vld [vmem:[%s1 + $0xe0] sm:$0xff]
  %v100 = vld [vmem:[%s1 + $0xe8] sm:$0xff]
  %v101 = vld [vmem:[%s1 + $0xf0] sm:$0xff]
  %v102 = vld [vmem:[%s1 + $0xf8] sm:$0xff]
  %v103 = vld [vmem:[%s1 + $0x100] sm:$0xff]
  %v104 = vld [vmem:[%s1 + $0x108] sm:$0xff]
  %v105 = vld [vmem:[%s1 + $0x110] sm:$0xff]
  %v106 = vld [vmem:[%s1 + $0x118] sm:$0xff]
  %vm119 = vcmask 1046528
  %v120 = vrot.slane %v59, 1
  %v121 = vrot.slane %v61, 1
  %v122 = vsel %vm119, %v120, %v121
  %v123 = vrot.slane %v60, 1
  %v124 = vrot.slane %v62, 1
  %v125 = vsel %vm119, %v123, %v124
  %v126 = vrot.slane %v63, 1
  %v127 = vsel %vm119, %v121, %v126
  %v128 = vrot.slane %v64, 1
  %v129 = vsel %vm119, %v124, %v128
  %v130 = vrot.slane %v65, 1
  %v131 = vrot.slane %v67, 1
  %v132 = vsel %vm119, %v130, %v131
  %v133 = vrot.slane %v66, 1
  %v134 = vrot.slane %v68, 1
  %v135 = vsel %vm119, %v133, %v134
  %v136 = vrot.slane %v69, 1
  %v137 = vsel %vm119, %v131, %v136
  %v138 = vrot.slane %v70, 1
  %v139 = vsel %vm119, %v134, %v138
  %s144 = scalar_lea.vmem %s1, 288
  %v145 = vld [vmem:[%s144] sm:$0xff]
  %v146 = vld [vmem:[%s144 + $0x8] sm:$0xff]
  %v147 = vld [vmem:[%s144 + $0x10] sm:$0xff]
  %v148 = vld [vmem:[%s144 + $0x18] sm:$0xff]
  %v149 = vld [vmem:[%s144 + $0x20] sm:$0xff]
  %v150 = vld [vmem:[%s144 + $0x28] sm:$0xff]
  %v151 = vld [vmem:[%s144 + $0x30] sm:$0xff]
  %v152 = vld [vmem:[%s144 + $0x38] sm:$0xff]
  %v153 = vld [vmem:[%s144 + $0x40] sm:$0xff]
  %v154 = vld [vmem:[%s144 + $0x48] sm:$0xff]
  %v155 = vld [vmem:[%s144 + $0x50] sm:$0xff]
  %v156 = vld [vmem:[%s144 + $0x58] sm:$0xff]
  %v157 = vld [vmem:[%s144 + $0x60] sm:$0xff]
  %v158 = vld [vmem:[%s144 + $0x68] sm:$0xff]
  %v159 = vld [vmem:[%s144 + $0x70] sm:$0xff]
  %v160 = vld [vmem:[%s144 + $0x78] sm:$0xff]
  %v161 = vld [vmem:[%s144 + $0x80] sm:$0xff]
  %v162 = vld [vmem:[%s144 + $0x88] sm:$0xff]
  %v163 = vld [vmem:[%s144 + $0x90] sm:$0xff]
  %v164 = vld [vmem:[%s144 + $0x98] sm:$0xff]
  %v165 = vld [vmem:[%s144 + $0xa0] sm:$0xff]
  %v166 = vld [vmem:[%s144 + $0xa8] sm:$0xff]
  %v167 = vld [vmem:[%s144 + $0xb0] sm:$0xff]
  %v168 = vld [vmem:[%s144 + $0xb8] sm:$0xff]
  %v169 = vld [vmem:[%s144 + $0xc0] sm:$0xff]
  %v170 = vld [vmem:[%s144 + $0xc8] sm:$0xff]
  %v171 = vld [vmem:[%s144 + $0xd0] sm:$0xff]
  %v172 = vld [vmem:[%s144 + $0xd8] sm:$0xff]
  %v173 = vld [vmem:[%s144 + $0xe0] sm:$0xff]
  %v174 = vld [vmem:[%s144 + $0xe8] sm:$0xff]
  %v175 = vld [vmem:[%s144 + $0xf0] sm:$0xff]
  %v176 = vld [vmem:[%s144 + $0xf8] sm:$0xff]
  %v177 = vld [vmem:[%s144 + $0x100] sm:$0xff]
  %v178 = vld [vmem:[%s144 + $0x108] sm:$0xff]
  %v179 = vld [vmem:[%s144 + $0x110] sm:$0xff]
  %v180 = vld [vmem:[%s144 + $0x118] sm:$0xff]
  %vm181 = vcmask 130048
  %v182 = vsel %vm181, %v125, 0
  %v184 = vsel %vm181, %v129, 0
  %v186 = vsel %vm181, %v135, 0
  %v188 = vsel %vm181, %v139, 0
  %190 = vmatprep.subr.mxu0 %v146
  %191 = vmatpush1.msra.mxu0 %v145
  %192 = vmatprep.subr.mxu0 %v148
  %193 = vmatpush1.msra.mxu0 %v147
  %194 = vmatprep.subr.mxu0 %v150
  %195 = vmatpush1.msra.mxu0 %v149
  %196 = vmatprep.subr.mxu0 %v152
  %197 = vmatpush1.msra.mxu0 %v151
  %198 = vmatprep.subr.mxu0 %v154
  %199 = vmatpush1.msra.mxu0 %v153
  %200 = vmatprep.subr.mxu0 %v156
  %201 = vmatpush1.msra.mxu0 %v155
  %202 = vmatprep.subr.mxu0 %v158
  %203 = vmatpush1.msra.mxu0 %v157
  %204 = vmatprep.subr.mxu0 %v160
  %205 = vmatpush1.msra.mxu0 %v159
  %206 = vmatprep.subr.mxu0 %v162
  %207 = vmatpush1.msra.mxu0 %v161
  %208 = vmatprep.subr.mxu0 %v164
  %209 = vmatpush1.msra.mxu0 %v163
  %210 = vmatprep.subr.mxu0 %v166
  %211 = vmatpush1.msra.mxu0 %v165
  %212 = vmatprep.subr.mxu0 %v168
  %213 = vmatpush1.msra.mxu0 %v167
  %214 = vmatprep.subr.mxu0 %v170
  %215 = vmatpush1.msra.mxu0 %v169
  %216 = vmatprep.subr.mxu0 %v172
  %217 = vmatpush1.msra.mxu0 %v171
  %218 = vmatprep.subr.mxu0 %v174
  %219 = vmatpush1.msra.mxu0 %v173
  %220 = vmatprep.subr.mxu0 %v176
  %221 = vmatpush1.msra.mxu0 %v175
  %222 = vmatprep.subr.mxu0 %v178
  %223 = vmatpush1.msra.mxu0 %v177
  %224 = vmatprep.subr.mxu0 %v180
  %225 = vmatpush1.msra.mxu0 %v179
  %226 = vmatprep.subr.mxu0 0.0
  %227 = vmatpush1.msra.mxu0 0.0
  %228 = vmatprep.subr.mxu0 0.0
  %229 = vmatpush1.msra.mxu0 0.0
  %230 = vmatprep.subr.mxu0 0.0
  %231 = vmatpush1.msra.mxu0 0.0
  %232 = vmatprep.subr.mxu0 0.0
  %233 = vmatpush1.msra.mxu0 0.0
  %234 = vmatprep.subr.mxu0 0.0
  %235 = vmatpush1.msra.mxu0 0.0
  %236 = vmatprep.subr.mxu0 0.0
  %237 = vmatpush1.msra.mxu0 0.0
  %238 = vmatprep.subr.mxu0 0.0
  %239 = vmatpush1.msra.mxu0 0.0
  %240 = vmatprep.subr.mxu0 0.0
  %241 = vmatpush1.msra.mxu0 0.0
  %242 = vmatprep.subr.mxu0 0.0
  %243 = vmatpush1.msra.mxu0 0.0
  %244 = vmatprep.subr.mxu0 0.0
  %245 = vmatpush1.msra.mxu0 0.0
  %246 = vmatprep.subr.mxu0 0.0
  %247 = vmatpush1.msra.mxu0 0.0
  %248 = vmatprep.subr.mxu0 0.0
  %249 = vmatpush1.msra.mxu0 0.0
  %250 = vmatprep.subr.mxu0 0.0
  %251 = vmatpush1.msra.mxu0 0.0
  %252 = vmatprep.subr.mxu0 0.0
  %253 = vmatpush1.msra.mxu0 0.0
  %254 = vmatprep.mubr.f32.mxu0 %v182
  %255 = vmatmul.mubr.f32.gmra.mrb[0].mxu0 %v122
  %v256 = vpop.f32.mrb[0].mxu0
  %v257 = vadd.f32 0.0, %v256
  %v258 = vpop.f32.mrb[0].mxu0
  %v259 = vadd.f32 0.0, %v258
  %260 = vmatprep.mubr.f32.mxu0 %v184
  %261 = vmatmul.mubr.f32.gmra.mrb[0].mxu0 %v127
  %v262 = vpop.f32.mrb[0].mxu0
  %v263 = vadd.f32 0.0, %v262
  %v264 = vpop.f32.mrb[0].mxu0
  %v265 = vadd.f32 0.0, %v264
  %266 = vmatprep.mubr.f32.mxu0 %v186
  %267 = vmatmul.mubr.f32.gmra.mrb[0].mxu0 %v132
  %v268 = vpop.f32.mrb[0].mxu0
  %v269 = vadd.f32 0.0, %v268
  %v270 = vpop.f32.mrb[0].mxu0
  %v271 = vadd.f32 0.0, %v270
  %272 = vmatprep.mubr.f32.mxu0 %v188
  %273 = vmatmul.mubr.f32.gmra.mrb[0].mxu0 %v137
  %v274 = vpop.f32.mrb[0].mxu0
  %v275 = vadd.f32 0.0, %v274
  %v276 = vpop.f32.mrb[0].mxu0
  %v277 = vadd.f32 0.0, %v276
  %278 = vdwg.mxu0
  %v279 = vsel %vm181, %v60, 0
  %v281 = vsel %vm181, %v62, 0
  %v283 = vsel %vm181, %v66, 0
  %v285 = vsel %vm181, %v68, 0
  %287 = vmatprep.subr.mxu0 %v72
  %288 = vmatpush1.msra.mxu0 %v71
  %289 = vmatprep.subr.mxu0 %v74
  %290 = vmatpush1.msra.mxu0 %v73
  %291 = vmatprep.subr.mxu0 %v76
  %292 = vmatpush1.msra.mxu0 %v75
  %293 = vmatprep.subr.mxu0 %v78
  %294 = vmatpush1.msra.mxu0 %v77
  %295 = vmatprep.subr.mxu0 %v80
  %296 = vmatpush1.msra.mxu0 %v79
  %297 = vmatprep.subr.mxu0 %v82
  %298 = vmatpush1.msra.mxu0 %v81
  %299 = vmatprep.subr.mxu0 %v84
  %300 = vmatpush1.msra.mxu0 %v83
  %301 = vmatprep.subr.mxu0 %v86
  %302 = vmatpush1.msra.mxu0 %v85
  %303 = vmatprep.subr.mxu0 %v88
  %304 = vmatpush1.msra.mxu0 %v87
  %305 = vmatprep.subr.mxu0 %v90
  %306 = vmatpush1.msra.mxu0 %v89
  %307 = vmatprep.subr.mxu0 %v92
  %308 = vmatpush1.msra.mxu0 %v91
  %309 = vmatprep.subr.mxu0 %v94
  %310 = vmatpush1.msra.mxu0 %v93
  %311 = vmatprep.subr.mxu0 %v96
  %312 = vmatpush1.msra.mxu0 %v95
  %313 = vmatprep.subr.mxu0 %v98
  %314 = vmatpush1.msra.mxu0 %v97
  %315 = vmatprep.subr.mxu0 %v100
  %316 = vmatpush1.msra.mxu0 %v99
  %317 = vmatprep.subr.mxu0 %v102
  %318 = vmatpush1.msra.mxu0 %v101
  %319 = vmatprep.subr.mxu0 %v104
  %320 = vmatpush1.msra.mxu0 %v103
  %321 = vmatprep.subr.mxu0 %v106
  %322 = vmatpush1.msra.mxu0 %v105
  %323 = vmatprep.subr.mxu0 0.0
  %324 = vmatpush1.msra.mxu0 0.0
  %325 = vmatprep.subr.mxu0 0.0
  %326 = vmatpush1.msra.mxu0 0.0
  %327 = vmatprep.subr.mxu0 0.0
  %328 = vmatpush1.msra.mxu0 0.0
  %329 = vmatprep.subr.mxu0 0.0
  %330 = vmatpush1.msra.mxu0 0.0
  %331 = vmatprep.subr.mxu0 0.0
  %332 = vmatpush1.msra.mxu0 0.0
  %333 = vmatprep.subr.mxu0 0.0
  %334 = vmatpush1.msra.mxu0 0.0
  %335 = vmatprep.subr.mxu0 0.0
  %336 = vmatpush1.msra.mxu0 0.0
  %337 = vmatprep.subr.mxu0 0.0
  %338 = vmatpush1.msra.mxu0 0.0
  %339 = vmatprep.subr.mxu0 0.0
  %340 = vmatpush1.msra.mxu0 0.0
  %341 = vmatprep.subr.mxu0 0.0
  %342 = vmatpush1.msra.mxu0 0.0
  %343 = vmatprep.subr.mxu0 0.0
  %344 = vmatpush1.msra.mxu0 0.0
  %345 = vmatprep.subr.mxu0 0.0
  %346 = vmatpush1.msra.mxu0 0.0
  %347 = vmatprep.subr.mxu0 0.0
  %348 = vmatpush1.msra.mxu0 0.0
  %349 = vmatprep.subr.mxu0 0.0
  %350 = vmatpush1.msra.mxu0 0.0
  %351 = vmatprep.mubr.f32.mxu0 %v279
  %352 = vmatmul.mubr.f32.gmra.mrb[0].mxu0 %v59
  %v353 = vpop.f32.mrb[0].mxu0
  %v354 = vadd.f32 %v257, %v353
  %v355 = vpop.f32.mrb[0].mxu0
  %v356 = vadd.f32 %v259, %v355
  %357 = vmatprep.mubr.f32.mxu0 %v281
  %358 = vmatmul.mubr.f32.gmra.mrb[0].mxu0 %v61
  %v359 = vpop.f32.mrb[0].mxu0
  %v360 = vadd.f32 %v263, %v359
  %v361 = vpop.f32.mrb[0].mxu0
  %v362 = vadd.f32 %v265, %v361
  %363 = vmatprep.mubr.f32.mxu0 %v283
  %364 = vmatmul.mubr.f32.gmra.mrb[0].mxu0 %v65
  %v365 = vpop.f32.mrb[0].mxu0
  %v366 = vadd.f32 %v269, %v365
  %v367 = vpop.f32.mrb[0].mxu0
  %v368 = vadd.f32 %v271, %v367
  %369 = vmatprep.mubr.f32.mxu0 %v285
  %370 = vmatmul.mubr.f32.gmra.mrb[0].mxu0 %v67
  %v371 = vpop.f32.mrb[0].mxu0
  %v372 = vadd.f32 %v275, %v371
  %v373 = vpop.f32.mrb[0].mxu0
  %v374 = vadd.f32 %v277, %v373
  %375 = vdwg.mxu0
  %vm376 = vcmask 1045504
  %v377 = vrot.slane %v59, 2
  %v378 = vrot.slane %v61, 2
  %v379 = vsel %vm376, %v377, %v378
  %v380 = vrot.slane %v60, 2
  %v381 = vrot.slane %v62, 2
  %v382 = vsel %vm376, %v380, %v381
  %v383 = vrot.slane %v63, 2
  %v384 = vsel %vm376, %v378, %v383
  %v385 = vrot.slane %v64, 2
  %v386 = vsel %vm376, %v381, %v385
  %v387 = vrot.slane %v65, 2
  %v388 = vrot.slane %v67, 2
  %v389 = vsel %vm376, %v387, %v388
  %v390 = vrot.slane %v66, 2
  %v391 = vrot.slane %v68, 2
  %v392 = vsel %vm376, %v390, %v391
  %v393 = vrot.slane %v69, 2
  %v394 = vsel %vm376, %v388, %v393
  %v395 = vrot.slane %v70, 2
  %v396 = vsel %vm376, %v391, %v395
  %s401 = scalar_lea.vmem %s1, 576
  %v402 = vld [vmem:[%s401] sm:$0xff]
  %v403 = vld [vmem:[%s401 + $0x8] sm:$0xff]
  %v404 = vld [vmem:[%s401 + $0x10] sm:$0xff]
  %v405 = vld [vmem:[%s401 + $0x18] sm:$0xff]
  %v406 = vld [vmem:[%s401 + $0x20] sm:$0xff]
  %v407 = vld [vmem:[%s401 + $0x28] sm:$0xff]
  %v408 = vld [vmem:[%s401 + $0x30] sm:$0xff]
  %v409 = vld [vmem:[%s401 + $0x38] sm:$0xff]
  %v410 = vld [vmem:[%s401 + $0x40] sm:$0xff]
  %v411 = vld [vmem:[%s401 + $0x48] sm:$0xff]
  %v412 = vld [vmem:[%s401 + $0x50] sm:$0xff]
  %v413 = vld [vmem:[%s401 + $0x58] sm:$0xff]
  %v414 = vld [vmem:[%s401 + $0x60] sm:$0xff]
  %v415 = vld [vmem:[%s401 + $0x68] sm:$0xff]
  %v416 = vld [vmem:[%s401 + $0x70] sm:$0xff]
  %v417 = vld [vmem:[%s401 + $0x78] sm:$0xff]
  %v418 = vld [vmem:[%s401 + $0x80] sm:$0xff]
  %v419 = vld [vmem:[%s401 + $0x88] sm:$0xff]
  %v420 = vld [vmem:[%s401 + $0x90] sm:$0xff]
  %v421 = vld [vmem:[%s401 + $0x98] sm:$0xff]
  %v422 = vld [vmem:[%s401 + $0xa0] sm:$0xff]
  %v423 = vld [vmem:[%s401 + $0xa8] sm:$0xff]
  %v424 = vld [vmem:[%s401 + $0xb0] sm:$0xff]
  %v425 = vld [vmem:[%s401 + $0xb8] sm:$0xff]
  %v426 = vld [vmem:[%s401 + $0xc0] sm:$0xff]
  %v427 = vld [vmem:[%s401 + $0xc8] sm:$0xff]
  %v428 = vld [vmem:[%s401 + $0xd0] sm:$0xff]
  %v429 = vld [vmem:[%s401 + $0xd8] sm:$0xff]
  %v430 = vld [vmem:[%s401 + $0xe0] sm:$0xff]
  %v431 = vld [vmem:[%s401 + $0xe8] sm:$0xff]
  %v432 = vld [vmem:[%s401 + $0xf0] sm:$0xff]
  %v433 = vld [vmem:[%s401 + $0xf8] sm:$0xff]
  %v434 = vld [vmem:[%s401 + $0x100] sm:$0xff]
  %v435 = vld [vmem:[%s401 + $0x108] sm:$0xff]
  %v436 = vld [vmem:[%s401 + $0x110] sm:$0xff]
  %v437 = vld [vmem:[%s401 + $0x118] sm:$0xff]
  %v438 = vsel %vm181, %v382, 0
  %v440 = vsel %vm181, %v386, 0
  %v442 = vsel %vm181, %v392, 0
  %v444 = vsel %vm181, %v396, 0
  %446 = vmatprep.subr.mxu0 %v403
  %447 = vmatpush1.msra.mxu0 %v402
  %448 = vmatprep.subr.mxu0 %v405
  %449 = vmatpush1.msra.mxu0 %v404
  %450 = vmatprep.subr.mxu0 %v407
  %451 = vmatpush1.msra.mxu0 %v406
  %452 = vmatprep.subr.mxu0 %v409
  %453 = vmatpush1.msra.mxu0 %v408
  %454 = vmatprep.subr.mxu0 %v411
  %455 = vmatpush1.msra.mxu0 %v410
  %456 = vmatprep.subr.mxu0 %v413
  %457 = vmatpush1.msra.mxu0 %v412
  %458 = vmatprep.subr.mxu0 %v415
  %459 = vmatpush1.msra.mxu0 %v414
  %460 = vmatprep.subr.mxu0 %v417
  %461 = vmatpush1.msra.mxu0 %v416
  %462 = vmatprep.subr.mxu0 %v419
  %463 = vmatpush1.msra.mxu0 %v418
  %464 = vmatprep.subr.mxu0 %v421
  %465 = vmatpush1.msra.mxu0 %v420
  %466 = vmatprep.subr.mxu0 %v423
  %467 = vmatpush1.msra.mxu0 %v422
  %468 = vmatprep.subr.mxu0 %v425
  %469 = vmatpush1.msra.mxu0 %v424
  %470 = vmatprep.subr.mxu0 %v427
  %471 = vmatpush1.msra.mxu0 %v426
  %472 = vmatprep.subr.mxu0 %v429
  %473 = vmatpush1.msra.mxu0 %v428
  %474 = vmatprep.subr.mxu0 %v431
  %475 = vmatpush1.msra.mxu0 %v430
  %476 = vmatprep.subr.mxu0 %v433
  %477 = vmatpush1.msra.mxu0 %v432
  %478 = vmatprep.subr.mxu0 %v435
  %479 = vmatpush1.msra.mxu0 %v434
  %480 = vmatprep.subr.mxu0 %v437
  %481 = vmatpush1.msra.mxu0 %v436
  %482 = vmatprep.subr.mxu0 0.0
  %483 = vmatpush1.msra.mxu0 0.0
  %484 = vmatprep.subr.mxu0 0.0
  %485 = vmatpush1.msra.mxu0 0.0
  %486 = vmatprep.subr.mxu0 0.0
  %487 = vmatpush1.msra.mxu0 0.0
  %488 = vmatprep.subr.mxu0 0.0
  %489 = vmatpush1.msra.mxu0 0.0
  %490 = vmatprep.subr.mxu0 0.0
  %491 = vmatpush1.msra.mxu0 0.0
  %492 = vmatprep.subr.mxu0 0.0
  %493 = vmatpush1.msra.mxu0 0.0
  %494 = vmatprep.subr.mxu0 0.0
  %495 = vmatpush1.msra.mxu0 0.0
  %496 = vmatprep.subr.mxu0 0.0
  %497 = vmatpush1.msra.mxu0 0.0
  %498 = vmatprep.subr.mxu0 0.0
  %499 = vmatpush1.msra.mxu0 0.0
  %500 = vmatprep.subr.mxu0 0.0
  %501 = vmatpush1.msra.mxu0 0.0
  %502 = vmatprep.subr.mxu0 0.0
  %503 = vmatpush1.msra.mxu0 0.0
  %504 = vmatprep.subr.mxu0 0.0
  %505 = vmatpush1.msra.mxu0 0.0
  %506 = vmatprep.subr.mxu0 0.0
  %507 = vmatpush1.msra.mxu0 0.0
  %508 = vmatprep.subr.mxu0 0.0
  %509 = vmatpush1.msra.mxu0 0.0
  %510 = vmatprep.mubr.f32.mxu0 %v438
  %511 = vmatmul.mubr.f32.gmra.mrb[0].mxu0 %v379
  %v512 = vpop.f32.mrb[0].mxu0
  %v513 = vadd.f32 0.0, %v512
  %v514 = vpop.f32.mrb[0].mxu0
  %v515 = vadd.f32 0.0, %v514
  %516 = vmatprep.mubr.f32.mxu0 %v440
  %517 = vmatmul.mubr.f32.gmra.mrb[0].mxu0 %v384
  %v518 = vpop.f32.mrb[0].mxu0
  %v519 = vadd.f32 0.0, %v518
  %v520 = vpop.f32.mrb[0].mxu0
  %v521 = vadd.f32 0.0, %v520
  %522 = vmatprep.mubr.f32.mxu0 %v442
  %523 = vmatmul.mubr.f32.gmra.mrb[0].mxu0 %v389
  %v524 = vpop.f32.mrb[0].mxu0
  %v525 = vadd.f32 0.0, %v524
  %v526 = vpop.f32.mrb[0].mxu0
  %v527 = vadd.f32 0.0, %v526
  %528 = vmatprep.mubr.f32.mxu0 %v444
  %529 = vmatmul.mubr.f32.gmra.mrb[0].mxu0 %v394
  %v530 = vpop.f32.mrb[0].mxu0
  %v531 = vadd.f32 0.0, %v530
  %v532 = vpop.f32.mrb[0].mxu0
  %v533 = vadd.f32 0.0, %v532
  %534 = vdwg.mxu0
  %v535 = vadd.f32 %v354, %v513
  %v536 = vadd.f32 %v356, %v515
  %v537 = vadd.f32 %v360, %v519
  %v538 = vadd.f32 %v362, %v521
  %v539 = vadd.f32 %v366, %v525
  %v540 = vadd.f32 %v368, %v527
  %v541 = vadd.f32 %v372, %v531
  %v542 = vadd.f32 %v374, %v533
  %v543 = vld [vmem:[%s2] sm:$0x3]
  %v545 = vlaneseq
  %v546 = vshrl.u32 %v545, 7
  %v547 = vsub.s32 0, %v546
  %v548 = vrot.slane %v543, %v547
  %v549 = vlaneseq
  %v550 = vshrl.u32 %v549, 7
  %v551 = vsub.s32 1, %v550
  %v552 = vrot.slane %v543, %v551
  %v555 = vadd.f32 %v535, %v548
  %v556 = vadd.f32 %v536, %v552
  %v557 = vadd.f32 %v537, %v548
  %v558 = vadd.f32 %v538, %v552
  %v559 = vadd.f32 %v539, %v548
  %v560 = vadd.f32 %v540, %v552
  %v561 = vadd.f32 %v541, %v548
  %v562 = vadd.f32 %v542, %v552
  %v563 = vmax.f32 %v555, 0.0
  %v564 = vmax.f32 %v556, 0.0
  %v565 = vmax.f32 %v557, 0.0
  %v566 = vmax.f32 %v558, 0.0
  %v567 = vmax.f32 %v559, 0.0
  %v568 = vmax.f32 %v560, 0.0
  %v569 = vmax.f32 %v561, 0.0
  %v570 = vmax.f32 %v562, 0.0
  %v571 = vadd.f32 %v563, %v565
  %v572 = vadd.f32 %v571, %v567
  %v573 = vadd.f32 %v572, %v569
  %v574 = vrot.slane %v573, 4
  %v575 = vadd.f32 %v573, %v574
  %v576 = vrot.slane %v575, 2
  %v577 = vadd.f32 %v575, %v576
  %v578 = vrot.slane %v577, 1
  %v579 = vadd.f32 %v577, %v578
  %v580 = vsel %vm181, %v564, 0.0
  %v581 = vsel %vm181, %v566, 0.0
  %v582 = vadd.f32 %v580, %v581
  %v583 = vsel %vm181, %v568, 0.0
  %v584 = vadd.f32 %v582, %v583
  %v585 = vsel %vm181, %v570, 0.0
  %v586 = vadd.f32 %v584, %v585
  %v587 = vrot.slane %v586, 4
  %v588 = vadd.f32 %v586, %v587
  %v589 = vrot.slane %v588, 2
  %v590 = vadd.f32 %v588, %v589
  %v591 = vrot.slane %v590, 1
  %v592 = vadd.f32 %v590, %v591
  %v593 = vmul.f32 %v563, %v563
  %v594 = vmul.f32 %v564, %v564
  %v595 = vmul.f32 %v565, %v565
  %v596 = vmul.f32 %v566, %v566
  %v597 = vmul.f32 %v567, %v567
  %v598 = vmul.f32 %v568, %v568
  %v599 = vmul.f32 %v569, %v569
  %v600 = vmul.f32 %v570, %v570
  %v601 = vadd.f32 %v593, %v595
  %v602 = vadd.f32 %v601, %v597
  %v603 = vadd.f32 %v602, %v599
  %v604 = vrot.slane %v603, 4
  %v605 = vadd.f32 %v603, %v604
  %v606 = vrot.slane %v605, 2
  %v607 = vadd.f32 %v605, %v606
  %v608 = vrot.slane %v607, 1
  %v609 = vadd.f32 %v607, %v608
  %v610 = vsel %vm181, %v594, 0.0
  %v611 = vsel %vm181, %v596, 0.0
  %v612 = vadd.f32 %v610, %v611
  %v613 = vsel %vm181, %v598, 0.0
  %v614 = vadd.f32 %v612, %v613
  %v615 = vsel %vm181, %v600, 0.0
  %v616 = vadd.f32 %v614, %v615
  %v617 = vrot.slane %v616, 4
  %v618 = vadd.f32 %v616, %v617
  %v619 = vrot.slane %v618, 2
  %v620 = vadd.f32 %v618, %v619
  %v621 = vrot.slane %v620, 1
  %v622 = vadd.f32 %v620, %v621
  %vm623 = vcmask 1040384
  %v624 = vsel %vm623, %v579, %v609
  %v625 = vsel %vm623, %v592, %v622
  %v627 = vsel %vm181, %v625, 0
  %629 = vmatprep.subr.mxu0 %v24
  %630 = vmatpush1.msra.mxu0 %v23
  %631 = vmatprep.subr.mxu0 %v26
  %632 = vmatpush1.msra.mxu0 %v25
  %633 = vmatprep.subr.mxu0 %v28
  %634 = vmatpush1.msra.mxu0 %v27
  %635 = vmatprep.subr.mxu0 %v30
  %636 = vmatpush1.msra.mxu0 %v29
  %637 = vmatprep.subr.mxu0 %v32
  %638 = vmatpush1.msra.mxu0 %v31
  %639 = vmatprep.subr.mxu0 %v34
  %640 = vmatpush1.msra.mxu0 %v33
  %641 = vmatprep.subr.mxu0 %v36
  %642 = vmatpush1.msra.mxu0 %v35
  %643 = vmatprep.subr.mxu0 %v38
  %644 = vmatpush1.msra.mxu0 %v37
  %645 = vmatprep.subr.mxu0 %v40
  %646 = vmatpush1.msra.mxu0 %v39
  %647 = vmatprep.subr.mxu0 %v42
  %648 = vmatpush1.msra.mxu0 %v41
  %649 = vmatprep.subr.mxu0 %v44
  %650 = vmatpush1.msra.mxu0 %v43
  %651 = vmatprep.subr.mxu0 %v46
  %652 = vmatpush1.msra.mxu0 %v45
  %653 = vmatprep.subr.mxu0 %v48
  %654 = vmatpush1.msra.mxu0 %v47
  %655 = vmatprep.subr.mxu0 %v50
  %656 = vmatpush1.msra.mxu0 %v49
  %657 = vmatprep.subr.mxu0 %v52
  %658 = vmatpush1.msra.mxu0 %v51
  %659 = vmatprep.subr.mxu0 %v54
  %660 = vmatpush1.msra.mxu0 %v53
  %661 = vmatprep.subr.mxu0 %v56
  %662 = vmatpush1.msra.mxu0 %v55
  %663 = vmatprep.subr.mxu0 %v58
  %664 = vmatpush1.msra.mxu0 %v57
  %665 = vmatprep.subr.mxu0 0.0
  %666 = vmatpush1.msra.mxu0 0.0
  %667 = vmatprep.subr.mxu0 0.0
  %668 = vmatpush1.msra.mxu0 0.0
  %669 = vmatprep.subr.mxu0 0.0
  %670 = vmatpush1.msra.mxu0 0.0
  %671 = vmatprep.subr.mxu0 0.0
  %672 = vmatpush1.msra.mxu0 0.0
  %673 = vmatprep.subr.mxu0 0.0
  %674 = vmatpush1.msra.mxu0 0.0
  %675 = vmatprep.subr.mxu0 0.0
  %676 = vmatpush1.msra.mxu0 0.0
  %677 = vmatprep.subr.mxu0 0.0
  %678 = vmatpush1.msra.mxu0 0.0
  %679 = vmatprep.subr.mxu0 0.0
  %680 = vmatpush1.msra.mxu0 0.0
  %681 = vmatprep.subr.mxu0 0.0
  %682 = vmatpush1.msra.mxu0 0.0
  %683 = vmatprep.subr.mxu0 0.0
  %684 = vmatpush1.msra.mxu0 0.0
  %685 = vmatprep.subr.mxu0 0.0
  %686 = vmatpush1.msra.mxu0 0.0
  %687 = vmatprep.subr.mxu0 0.0
  %688 = vmatpush1.msra.mxu0 0.0
  %689 = vmatprep.subr.mxu0 0.0
  %690 = vmatpush1.msra.mxu0 0.0
  %691 = vmatprep.subr.mxu0 0.0
  %692 = vmatpush1.msra.mxu0 0.0
  %693 = vmatprep.mubr.f32.mxu0 %v627
  %694 = vmatmul.mubr.f32.gmra.mrb[0].mxu0 %v624
  %v695 = vpop.f32.mrb[0].mxu0
  %v696 = vadd.f32 0.0, %v695
  %v697 = vpop.f32.mrb[0].mxu0
  %v698 = vadd.f32 0.0, %v697
  %699 = vdwg.mxu0
  %v700 = vmul.f32 %v696, 0.001953125
  %v701 = vmul.f32 %v698, 0.001953125
  %v702 = vmul.f32 %v700, %v700
  %v703 = vmul.f32 %v701, %v701
  %v706 = vrot.slane %v702, 7
  %v707 = vrot.slane %v703, 7
  %v710 = vsub.f32 %v700, %v706
  %v711 = vsub.f32 %v701, %v707
  %v712 = vld [vmem:[%s3] sm:$0x3]
  %v713 = vadd.f32 %v710, 1e-05
  %v714 = vadd.f32 %v711, 1e-05
  %v715 = vrsqrt.pop %v713
  %v716 = vrsqrt.pop %v714
  %v719 = vcombine.low %v715, %v716
  %v721 = vunpack.c.l.s4 1966171168
  %v722 = vunpack.c.0.s8 %v721
  %v723 = vlaneseq
  %v724 = vshrl.u32 %v723, 7
  %v725 = vsub.s32 %v722, %v724
  %v726 = vrot.slane %v719, %v725
  %v727 = vcombine.high %v726, %v726
  %v729 = vunpack.c.l.s4 1966171168
  %v730 = vunpack.c.0.s8 %v729
  %v731 = vlaneseq
  %v732 = vshrl.u32 %v731, 7
  %v733 = vsub.s32 %v730, %v732
  %v734 = vrot.slane %v727, %v733
  %v736 = vmul.f32 %v712, %v734
  %v737 = vlaneseq
  %v738 = vshrl.u32 %v737, 7
  %v739 = vsub.s32 0, %v738
  %v740 = vrot.slane %v700, %v739
  %v741 = vlaneseq
  %v742 = vshrl.u32 %v741, 7
  %v743 = vsub.s32 0, %v742
  %v744 = vrot.slane %v701, %v743
  %v745 = vsub.f32 %v563, %v740
  %v746 = vsub.f32 %v564, %v744
  %v747 = vsub.f32 %v565, %v740
  %v748 = vsub.f32 %v566, %v744
  %v749 = vsub.f32 %v567, %v740
  %v750 = vsub.f32 %v568, %v744
  %v751 = vsub.f32 %v569, %v740
  %v752 = vsub.f32 %v570, %v744
  %v754 = vlaneseq
  %v755 = vshrl.u32 %v754, 7
  %v756 = vsub.s32 0, %v755
  %v757 = vrot.slane %v736, %v756
  %v758 = vlaneseq
  %v759 = vshrl.u32 %v758, 7
  %v760 = vsub.s32 1, %v759
  %v761 = vrot.slane %v736, %v760
  %v764 = vmul.f32 %v745, %v757
  %v765 = vmul.f32 %v746, %v761
  %v766 = vmul.f32 %v747, %v757
  %v767 = vmul.f32 %v748, %v761
  %v768 = vmul.f32 %v749, %v757
  %v769 = vmul.f32 %v750, %v761
  %v770 = vmul.f32 %v751, %v757
  %v771 = vmul.f32 %v752, %v761
  %v772 = vld [vmem:[%s4] sm:$0x3]
  %v774 = vlaneseq
  %v775 = vshrl.u32 %v774, 7
  %v776 = vsub.s32 0, %v775
  %v777 = vrot.slane %v772, %v776
  %v778 = vlaneseq
  %v779 = vshrl.u32 %v778, 7
  %v780 = vsub.s32 1, %v779
  %v781 = vrot.slane %v772, %v780
  %v784 = vadd.f32 %v764, %v777
  %v785 = vadd.f32 %v765, %v781
  %v786 = vadd.f32 %v766, %v777
  %v787 = vadd.f32 %v767, %v781
  %v788 = vadd.f32 %v768, %v777
  %v789 = vadd.f32 %v769, %v781
  %v790 = vadd.f32 %v770, %v777
  %v791 = vadd.f32 %v771, %v781
  %v800 = vrot.slane %v784, 7
  %v801 = vrot.slane %v785, 7
  %v802 = vrot.slane %v786, 7
  %v803 = vsel %vm623, %v800, %v802
  %v804 = vrot.slane %v787, 7
  %v805 = vsel %vm623, %v801, %v804
  %v806 = vrot.slane %v788, 7
  %v807 = vrot.slane %v789, 7
  %v808 = vrot.slane %v790, 7
  %v809 = vsel %vm623, %v806, %v808
  %v810 = vrot.slane %v791, 7
  %v811 = vsel %vm623, %v807, %v810
  %v822 = vsel %vm623, 0.0, %v800
  %v823 = vsel %vm623, 0.0, %v801
  %v824 = vsel %vm623, 0.0, %v806
  %v825 = vsel %vm623, 0.0, %v807
  %v826 = vsel %vm623, %v802, 0.0
  %v827 = vsel %vm623, %v804, 0.0
  %v828 = vsel %vm623, %v808, 0.0
  %v829 = vsel %vm623, %v810, 0.0
  %s830 = scalar_lea.vmem %s1, 864
  %v831 = vld [vmem:[%s830] sm:$0xff]
  %v832 = vld [vmem:[%s830 + $0x8] sm:$0xff]
  %v833 = vld [vmem:[%s830 + $0x10] sm:$0xff]
  %v834 = vld [vmem:[%s830 + $0x18] sm:$0xff]
  %v835 = vld [vmem:[%s830 + $0x20] sm:$0xff]
  %v836 = vld [vmem:[%s830 + $0x28] sm:$0xff]
  %v837 = vld [vmem:[%s830 + $0x30] sm:$0xff]
  %v838 = vld [vmem:[%s830 + $0x38] sm:$0xff]
  %v839 = vld [vmem:[%s830 + $0x40] sm:$0xff]
  %v840 = vld [vmem:[%s830 + $0x48] sm:$0xff]
  %v841 = vld [vmem:[%s830 + $0x50] sm:$0xff]
  %v842 = vld [vmem:[%s830 + $0x58] sm:$0xff]
  %v843 = vld [vmem:[%s830 + $0x60] sm:$0xff]
  %v844 = vld [vmem:[%s830 + $0x68] sm:$0xff]
  %v845 = vld [vmem:[%s830 + $0x70] sm:$0xff]
  %v846 = vld [vmem:[%s830 + $0x78] sm:$0xff]
  %v847 = vld [vmem:[%s830 + $0x80] sm:$0xff]
  %v848 = vld [vmem:[%s830 + $0x88] sm:$0xff]
  %v849 = vld [vmem:[%s830 + $0x90] sm:$0xff]
  %v850 = vld [vmem:[%s830 + $0x98] sm:$0xff]
  %v851 = vld [vmem:[%s830 + $0xa0] sm:$0xff]
  %v852 = vld [vmem:[%s830 + $0xa8] sm:$0xff]
  %v853 = vld [vmem:[%s830 + $0xb0] sm:$0xff]
  %v854 = vld [vmem:[%s830 + $0xb8] sm:$0xff]
  %v855 = vld [vmem:[%s830 + $0xc0] sm:$0xff]
  %v856 = vld [vmem:[%s830 + $0xc8] sm:$0xff]
  %v857 = vld [vmem:[%s830 + $0xd0] sm:$0xff]
  %v858 = vld [vmem:[%s830 + $0xd8] sm:$0xff]
  %v859 = vld [vmem:[%s830 + $0xe0] sm:$0xff]
  %v860 = vld [vmem:[%s830 + $0xe8] sm:$0xff]
  %v861 = vld [vmem:[%s830 + $0xf0] sm:$0xff]
  %v862 = vld [vmem:[%s830 + $0xf8] sm:$0xff]
  %v863 = vld [vmem:[%s830 + $0x100] sm:$0xff]
  %v864 = vld [vmem:[%s830 + $0x108] sm:$0xff]
  %v865 = vld [vmem:[%s830 + $0x110] sm:$0xff]
  %v866 = vld [vmem:[%s830 + $0x118] sm:$0xff]
  %v875 = vrot.slane %v822, 1
  %v876 = vrot.slane %v803, 1
  %v877 = vsel %vm119, %v875, %v876
  %v878 = vrot.slane %v823, 1
  %v879 = vrot.slane %v805, 1
  %v880 = vsel %vm119, %v878, %v879
  %v881 = vrot.slane %v826, 1
  %v882 = vsel %vm119, %v876, %v881
  %v883 = vrot.slane %v827, 1
  %v884 = vsel %vm119, %v879, %v883
  %v885 = vrot.slane %v824, 1
  %v886 = vrot.slane %v809, 1
  %v887 = vsel %vm119, %v885, %v886
  %v888 = vrot.slane %v825, 1
  %v889 = vrot.slane %v811, 1
  %v890 = vsel %vm119, %v888, %v889
  %v891 = vrot.slane %v828, 1
  %v892 = vsel %vm119, %v886, %v891
  %v893 = vrot.slane %v829, 1
  %v894 = vsel %vm119, %v889, %v893
  %s899 = scalar_lea.vmem %s1, 1152
  %v900 = vld [vmem:[%s899] sm:$0xff]
  %v901 = vld [vmem:[%s899 + $0x8] sm:$0xff]
  %v902 = vld [vmem:[%s899 + $0x10] sm:$0xff]
  %v903 = vld [vmem:[%s899 + $0x18] sm:$0xff]
  %v904 = vld [vmem:[%s899 + $0x20] sm:$0xff]
  %v905 = vld [vmem:[%s899 + $0x28] sm:$0xff]
  %v906 = vld [vmem:[%s899 + $0x30] sm:$0xff]
  %v907 = vld [vmem:[%s899 + $0x38] sm:$0xff]
  %v908 = vld [vmem:[%s899 + $0x40] sm:$0xff]
  %v909 = vld [vmem:[%s899 + $0x48] sm:$0xff]
  %v910 = vld [vmem:[%s899 + $0x50] sm:$0xff]
  %v911 = vld [vmem:[%s899 + $0x58] sm:$0xff]
  %v912 = vld [vmem:[%s899 + $0x60] sm:$0xff]
  %v913 = vld [vmem:[%s899 + $0x68] sm:$0xff]
  %v914 = vld [vmem:[%s899 + $0x70] sm:$0xff]
  %v915 = vld [vmem:[%s899 + $0x78] sm:$0xff]
  %v916 = vld [vmem:[%s899 + $0x80] sm:$0xff]
  %v917 = vld [vmem:[%s899 + $0x88] sm:$0xff]
  %v918 = vld [vmem:[%s899 + $0x90] sm:$0xff]
  %v919 = vld [vmem:[%s899 + $0x98] sm:$0xff]
  %v920 = vld [vmem:[%s899 + $0xa0] sm:$0xff]
  %v921 = vld [vmem:[%s899 + $0xa8] sm:$0xff]
  %v922 = vld [vmem:[%s899 + $0xb0] sm:$0xff]
  %v923 = vld [vmem:[%s899 + $0xb8] sm:$0xff]
  %v924 = vld [vmem:[%s899 + $0xc0] sm:$0xff]
  %v925 = vld [vmem:[%s899 + $0xc8] sm:$0xff]
  %v926 = vld [vmem:[%s899 + $0xd0] sm:$0xff]
  %v927 = vld [vmem:[%s899 + $0xd8] sm:$0xff]
  %v928 = vld [vmem:[%s899 + $0xe0] sm:$0xff]
  %v929 = vld [vmem:[%s899 + $0xe8] sm:$0xff]
  %v930 = vld [vmem:[%s899 + $0xf0] sm:$0xff]
  %v931 = vld [vmem:[%s899 + $0xf8] sm:$0xff]
  %v932 = vld [vmem:[%s899 + $0x100] sm:$0xff]
  %v933 = vld [vmem:[%s899 + $0x108] sm:$0xff]
  %v934 = vld [vmem:[%s899 + $0x110] sm:$0xff]
  %v935 = vld [vmem:[%s899 + $0x118] sm:$0xff]
  %v936 = vsel %vm181, %v880, 0
  %v938 = vsel %vm181, %v884, 0
  %v940 = vsel %vm181, %v890, 0
  %v942 = vsel %vm181, %v894, 0
  %944 = vmatprep.subr.mxu0 %v901
  %945 = vmatpush1.msra.mxu0 %v900
  %946 = vmatprep.subr.mxu0 %v903
  %947 = vmatpush1.msra.mxu0 %v902
  %948 = vmatprep.subr.mxu0 %v905
  %949 = vmatpush1.msra.mxu0 %v904
  %950 = vmatprep.subr.mxu0 %v907
  %951 = vmatpush1.msra.mxu0 %v906
  %952 = vmatprep.subr.mxu0 %v909
  %953 = vmatpush1.msra.mxu0 %v908
  %954 = vmatprep.subr.mxu0 %v911
  %955 = vmatpush1.msra.mxu0 %v910
  %956 = vmatprep.subr.mxu0 %v913
  %957 = vmatpush1.msra.mxu0 %v912
  %958 = vmatprep.subr.mxu0 %v915
  %959 = vmatpush1.msra.mxu0 %v914
  %960 = vmatprep.subr.mxu0 %v917
  %961 = vmatpush1.msra.mxu0 %v916
  %962 = vmatprep.subr.mxu0 %v919
  %963 = vmatpush1.msra.mxu0 %v918
  %964 = vmatprep.subr.mxu0 %v921
  %965 = vmatpush1.msra.mxu0 %v920
  %966 = vmatprep.subr.mxu0 %v923
  %967 = vmatpush1.msra.mxu0 %v922
  %968 = vmatprep.subr.mxu0 %v925
  %969 = vmatpush1.msra.mxu0 %v924
  %970 = vmatprep.subr.mxu0 %v927
  %971 = vmatpush1.msra.mxu0 %v926
  %972 = vmatprep.subr.mxu0 %v929
  %973 = vmatpush1.msra.mxu0 %v928
  %974 = vmatprep.subr.mxu0 %v931
  %975 = vmatpush1.msra.mxu0 %v930
  %976 = vmatprep.subr.mxu0 %v933
  %977 = vmatpush1.msra.mxu0 %v932
  %978 = vmatprep.subr.mxu0 %v935
  %979 = vmatpush1.msra.mxu0 %v934
  %980 = vmatprep.subr.mxu0 0.0
  %981 = vmatpush1.msra.mxu0 0.0
  %982 = vmatprep.subr.mxu0 0.0
  %983 = vmatpush1.msra.mxu0 0.0
  %984 = vmatprep.subr.mxu0 0.0
  %985 = vmatpush1.msra.mxu0 0.0
  %986 = vmatprep.subr.mxu0 0.0
  %987 = vmatpush1.msra.mxu0 0.0
  %988 = vmatprep.subr.mxu0 0.0
  %989 = vmatpush1.msra.mxu0 0.0
  %990 = vmatprep.subr.mxu0 0.0
  %991 = vmatpush1.msra.mxu0 0.0
  %992 = vmatprep.subr.mxu0 0.0
  %993 = vmatpush1.msra.mxu0 0.0
  %994 = vmatprep.subr.mxu0 0.0
  %995 = vmatpush1.msra.mxu0 0.0
  %996 = vmatprep.subr.mxu0 0.0
  %997 = vmatpush1.msra.mxu0 0.0
  %998 = vmatprep.subr.mxu0 0.0
  %999 = vmatpush1.msra.mxu0 0.0
  %1000 = vmatprep.subr.mxu0 0.0
  %1001 = vmatpush1.msra.mxu0 0.0
  %1002 = vmatprep.subr.mxu0 0.0
  %1003 = vmatpush1.msra.mxu0 0.0
  %1004 = vmatprep.subr.mxu0 0.0
  %1005 = vmatpush1.msra.mxu0 0.0
  %1006 = vmatprep.subr.mxu0 0.0
  %1007 = vmatpush1.msra.mxu0 0.0
  %1008 = vmatprep.mubr.f32.mxu0 %v936
  %1009 = vmatmul.mubr.f32.gmra.mrb[0].mxu0 %v877
  %v1010 = vpop.f32.mrb[0].mxu0
  %v1011 = vadd.f32 0.0, %v1010
  %v1012 = vpop.f32.mrb[0].mxu0
  %v1013 = vadd.f32 0.0, %v1012
  %1014 = vmatprep.mubr.f32.mxu0 %v938
  %1015 = vmatmul.mubr.f32.gmra.mrb[0].mxu0 %v882
  %v1016 = vpop.f32.mrb[0].mxu0
  %v1017 = vadd.f32 0.0, %v1016
  %v1018 = vpop.f32.mrb[0].mxu0
  %v1019 = vadd.f32 0.0, %v1018
  %1020 = vmatprep.mubr.f32.mxu0 %v940
  %1021 = vmatmul.mubr.f32.gmra.mrb[0].mxu0 %v887
  %v1022 = vpop.f32.mrb[0].mxu0
  %v1023 = vadd.f32 0.0, %v1022
  %v1024 = vpop.f32.mrb[0].mxu0
  %v1025 = vadd.f32 0.0, %v1024
  %1026 = vmatprep.mubr.f32.mxu0 %v942
  %1027 = vmatmul.mubr.f32.gmra.mrb[0].mxu0 %v892
  %v1028 = vpop.f32.mrb[0].mxu0
  %v1029 = vadd.f32 0.0, %v1028
  %v1030 = vpop.f32.mrb[0].mxu0
  %v1031 = vadd.f32 0.0, %v1030
  %1032 = vdwg.mxu0
  %v1033 = vsel %vm181, %v823, 0
  %v1035 = vsel %vm181, %v805, 0
  %v1037 = vsel %vm181, %v825, 0
  %v1039 = vsel %vm181, %v811, 0
  %1041 = vmatprep.subr.mxu0 %v832
  %1042 = vmatpush1.msra.mxu0 %v831
  %1043 = vmatprep.subr.mxu0 %v834
  %1044 = vmatpush1.msra.mxu0 %v833
  %1045 = vmatprep.subr.mxu0 %v836
  %1046 = vmatpush1.msra.mxu0 %v835
  %1047 = vmatprep.subr.mxu0 %v838
  %1048 = vmatpush1.msra.mxu0 %v837
  %1049 = vmatprep.subr.mxu0 %v840
  %1050 = vmatpush1.msra.mxu0 %v839
  %1051 = vmatprep.subr.mxu0 %v842
  %1052 = vmatpush1.msra.mxu0 %v841
  %1053 = vmatprep.subr.mxu0 %v844
  %1054 = vmatpush1.msra.mxu0 %v843
  %1055 = vmatprep.subr.mxu0 %v846
  %1056 = vmatpush1.msra.mxu0 %v845
  %1057 = vmatprep.subr.mxu0 %v848
  %1058 = vmatpush1.msra.mxu0 %v847
  %1059 = vmatprep.subr.mxu0 %v850
  %1060 = vmatpush1.msra.mxu0 %v849
  %1061 = vmatprep.subr.mxu0 %v852
  %1062 = vmatpush1.msra.mxu0 %v851
  %1063 = vmatprep.subr.mxu0 %v854
  %1064 = vmatpush1.msra.mxu0 %v853
  %1065 = vmatprep.subr.mxu0 %v856
  %1066 = vmatpush1.msra.mxu0 %v855
  %1067 = vmatprep.subr.mxu0 %v858
  %1068 = vmatpush1.msra.mxu0 %v857
  %1069 = vmatprep.subr.mxu0 %v860
  %1070 = vmatpush1.msra.mxu0 %v859
  %1071 = vmatprep.subr.mxu0 %v862
  %1072 = vmatpush1.msra.mxu0 %v861
  %1073 = vmatprep.subr.mxu0 %v864
  %1074 = vmatpush1.msra.mxu0 %v863
  %1075 = vmatprep.subr.mxu0 %v866
  %1076 = vmatpush1.msra.mxu0 %v865
  %1077 = vmatprep.subr.mxu0 0.0
  %1078 = vmatpush1.msra.mxu0 0.0
  %1079 = vmatprep.subr.mxu0 0.0
  %1080 = vmatpush1.msra.mxu0 0.0
  %1081 = vmatprep.subr.mxu0 0.0
  %1082 = vmatpush1.msra.mxu0 0.0
  %1083 = vmatprep.subr.mxu0 0.0
  %1084 = vmatpush1.msra.mxu0 0.0
  %1085 = vmatprep.subr.mxu0 0.0
  %1086 = vmatpush1.msra.mxu0 0.0
  %1087 = vmatprep.subr.mxu0 0.0
  %1088 = vmatpush1.msra.mxu0 0.0
  %1089 = vmatprep.subr.mxu0 0.0
  %1090 = vmatpush1.msra.mxu0 0.0
  %1091 = vmatprep.subr.mxu0 0.0
  %1092 = vmatpush1.msra.mxu0 0.0
  %1093 = vmatprep.subr.mxu0 0.0
  %1094 = vmatpush1.msra.mxu0 0.0
  %1095 = vmatprep.subr.mxu0 0.0
  %1096 = vmatpush1.msra.mxu0 0.0
  %1097 = vmatprep.subr.mxu0 0.0
  %1098 = vmatpush1.msra.mxu0 0.0
  %1099 = vmatprep.subr.mxu0 0.0
  %1100 = vmatpush1.msra.mxu0 0.0
  %1101 = vmatprep.subr.mxu0 0.0
  %1102 = vmatpush1.msra.mxu0 0.0
  %1103 = vmatprep.subr.mxu0 0.0
  %1104 = vmatpush1.msra.mxu0 0.0
  %1105 = vmatprep.mubr.f32.mxu0 %v1033
  %1106 = vmatmul.mubr.f32.gmra.mrb[0].mxu0 %v822
  %v1107 = vpop.f32.mrb[0].mxu0
  %v1108 = vadd.f32 %v1011, %v1107
  %v1109 = vpop.f32.mrb[0].mxu0
  %v1110 = vadd.f32 %v1013, %v1109
  %1111 = vmatprep.mubr.f32.mxu0 %v1035
  %1112 = vmatmul.mubr.f32.gmra.mrb[0].mxu0 %v803
  %v1113 = vpop.f32.mrb[0].mxu0
  %v1114 = vadd.f32 %v1017, %v1113
  %v1115 = vpop.f32.mrb[0].mxu0
  %v1116 = vadd.f32 %v1019, %v1115
  %1117 = vmatprep.mubr.f32.mxu0 %v1037
  %1118 = vmatmul.mubr.f32.gmra.mrb[0].mxu0 %v824
  %v1119 = vpop.f32.mrb[0].mxu0
  %v1120 = vadd.f32 %v1023, %v1119
  %v1121 = vpop.f32.mrb[0].mxu0
  %v1122 = vadd.f32 %v1025, %v1121
  %1123 = vmatprep.mubr.f32.mxu0 %v1039
  %1124 = vmatmul.mubr.f32.gmra.mrb[0].mxu0 %v809
  %v1125 = vpop.f32.mrb[0].mxu0
  %v1126 = vadd.f32 %v1029, %v1125
  %v1127 = vpop.f32.mrb[0].mxu0
  %v1128 = vadd.f32 %v1031, %v1127
  %1129 = vdwg.mxu0
  %v1130 = vrot.slane %v822, 2
  %v1131 = vrot.slane %v803, 2
  %v1132 = vsel %vm376, %v1130, %v1131
  %v1133 = vrot.slane %v823, 2
  %v1134 = vrot.slane %v805, 2
  %v1135 = vsel %vm376, %v1133, %v1134
  %v1136 = vrot.slane %v826, 2
  %v1137 = vsel %vm376, %v1131, %v1136
  %v1138 = vrot.slane %v827, 2
  %v1139 = vsel %vm376, %v1134, %v1138
  %v1140 = vrot.slane %v824, 2
  %v1141 = vrot.slane %v809, 2
  %v1142 = vsel %vm376, %v1140, %v1141
  %v1143 = vrot.slane %v825, 2
  %v1144 = vrot.slane %v811, 2
  %v1145 = vsel %vm376, %v1143, %v1144
  %v1146 = vrot.slane %v828, 2
  %v1147 = vsel %vm376, %v1141, %v1146
  %v1148 = vrot.slane %v829, 2
  %v1149 = vsel %vm376, %v1144, %v1148
  %s1154 = scalar_lea.vmem %s1, 1440
  %v1155 = vld [vmem:[%s1154] sm:$0xff]
  %v1156 = vld [vmem:[%s1154 + $0x8] sm:$0xff]
  %v1157 = vld [vmem:[%s1154 + $0x10] sm:$0xff]
  %v1158 = vld [vmem:[%s1154 + $0x18] sm:$0xff]
  %v1159 = vld [vmem:[%s1154 + $0x20] sm:$0xff]
  %v1160 = vld [vmem:[%s1154 + $0x28] sm:$0xff]
  %v1161 = vld [vmem:[%s1154 + $0x30] sm:$0xff]
  %v1162 = vld [vmem:[%s1154 + $0x38] sm:$0xff]
  %v1163 = vld [vmem:[%s1154 + $0x40] sm:$0xff]
  %v1164 = vld [vmem:[%s1154 + $0x48] sm:$0xff]
  %v1165 = vld [vmem:[%s1154 + $0x50] sm:$0xff]
  %v1166 = vld [vmem:[%s1154 + $0x58] sm:$0xff]
  %v1167 = vld [vmem:[%s1154 + $0x60] sm:$0xff]
  %v1168 = vld [vmem:[%s1154 + $0x68] sm:$0xff]
  %v1169 = vld [vmem:[%s1154 + $0x70] sm:$0xff]
  %v1170 = vld [vmem:[%s1154 + $0x78] sm:$0xff]
  %v1171 = vld [vmem:[%s1154 + $0x80] sm:$0xff]
  %v1172 = vld [vmem:[%s1154 + $0x88] sm:$0xff]
  %v1173 = vld [vmem:[%s1154 + $0x90] sm:$0xff]
  %v1174 = vld [vmem:[%s1154 + $0x98] sm:$0xff]
  %v1175 = vld [vmem:[%s1154 + $0xa0] sm:$0xff]
  %v1176 = vld [vmem:[%s1154 + $0xa8] sm:$0xff]
  %v1177 = vld [vmem:[%s1154 + $0xb0] sm:$0xff]
  %v1178 = vld [vmem:[%s1154 + $0xb8] sm:$0xff]
  %v1179 = vld [vmem:[%s1154 + $0xc0] sm:$0xff]
  %v1180 = vld [vmem:[%s1154 + $0xc8] sm:$0xff]
  %v1181 = vld [vmem:[%s1154 + $0xd0] sm:$0xff]
  %v1182 = vld [vmem:[%s1154 + $0xd8] sm:$0xff]
  %v1183 = vld [vmem:[%s1154 + $0xe0] sm:$0xff]
  %v1184 = vld [vmem:[%s1154 + $0xe8] sm:$0xff]
  %v1185 = vld [vmem:[%s1154 + $0xf0] sm:$0xff]
  %v1186 = vld [vmem:[%s1154 + $0xf8] sm:$0xff]
  %v1187 = vld [vmem:[%s1154 + $0x100] sm:$0xff]
  %v1188 = vld [vmem:[%s1154 + $0x108] sm:$0xff]
  %v1189 = vld [vmem:[%s1154 + $0x110] sm:$0xff]
  %v1190 = vld [vmem:[%s1154 + $0x118] sm:$0xff]
  %v1191 = vsel %vm181, %v1135, 0
  %v1193 = vsel %vm181, %v1139, 0
  %v1195 = vsel %vm181, %v1145, 0
  %v1197 = vsel %vm181, %v1149, 0
  %1199 = vmatprep.subr.mxu0 %v1156
  %1200 = vmatpush1.msra.mxu0 %v1155
  %1201 = vmatprep.subr.mxu0 %v1158
  %1202 = vmatpush1.msra.mxu0 %v1157
  %1203 = vmatprep.subr.mxu0 %v1160
  %1204 = vmatpush1.msra.mxu0 %v1159
  %1205 = vmatprep.subr.mxu0 %v1162
  %1206 = vmatpush1.msra.mxu0 %v1161
  %1207 = vmatprep.subr.mxu0 %v1164
  %1208 = vmatpush1.msra.mxu0 %v1163
  %1209 = vmatprep.subr.mxu0 %v1166
  %1210 = vmatpush1.msra.mxu0 %v1165
  %1211 = vmatprep.subr.mxu0 %v1168
  %1212 = vmatpush1.msra.mxu0 %v1167
  %1213 = vmatprep.subr.mxu0 %v1170
  %1214 = vmatpush1.msra.mxu0 %v1169
  %1215 = vmatprep.subr.mxu0 %v1172
  %1216 = vmatpush1.msra.mxu0 %v1171
  %1217 = vmatprep.subr.mxu0 %v1174
  %1218 = vmatpush1.msra.mxu0 %v1173
  %1219 = vmatprep.subr.mxu0 %v1176
  %1220 = vmatpush1.msra.mxu0 %v1175
  %1221 = vmatprep.subr.mxu0 %v1178
  %1222 = vmatpush1.msra.mxu0 %v1177
  %1223 = vmatprep.subr.mxu0 %v1180
  %1224 = vmatpush1.msra.mxu0 %v1179
  %1225 = vmatprep.subr.mxu0 %v1182
  %1226 = vmatpush1.msra.mxu0 %v1181
  %1227 = vmatprep.subr.mxu0 %v1184
  %1228 = vmatpush1.msra.mxu0 %v1183
  %1229 = vmatprep.subr.mxu0 %v1186
  %1230 = vmatpush1.msra.mxu0 %v1185
  %1231 = vmatprep.subr.mxu0 %v1188
  %1232 = vmatpush1.msra.mxu0 %v1187
  %1233 = vmatprep.subr.mxu0 %v1190
  %1234 = vmatpush1.msra.mxu0 %v1189
  %1235 = vmatprep.subr.mxu0 0.0
  %1236 = vmatpush1.msra.mxu0 0.0
  %1237 = vmatprep.subr.mxu0 0.0
  %1238 = vmatpush1.msra.mxu0 0.0
  %1239 = vmatprep.subr.mxu0 0.0
  %1240 = vmatpush1.msra.mxu0 0.0
  %1241 = vmatprep.subr.mxu0 0.0
  %1242 = vmatpush1.msra.mxu0 0.0
  %1243 = vmatprep.subr.mxu0 0.0
  %1244 = vmatpush1.msra.mxu0 0.0
  %1245 = vmatprep.subr.mxu0 0.0
  %1246 = vmatpush1.msra.mxu0 0.0
  %1247 = vmatprep.subr.mxu0 0.0
  %1248 = vmatpush1.msra.mxu0 0.0
  %1249 = vmatprep.subr.mxu0 0.0
  %1250 = vmatpush1.msra.mxu0 0.0
  %1251 = vmatprep.subr.mxu0 0.0
  %1252 = vmatpush1.msra.mxu0 0.0
  %1253 = vmatprep.subr.mxu0 0.0
  %1254 = vmatpush1.msra.mxu0 0.0
  %1255 = vmatprep.subr.mxu0 0.0
  %1256 = vmatpush1.msra.mxu0 0.0
  %1257 = vmatprep.subr.mxu0 0.0
  %1258 = vmatpush1.msra.mxu0 0.0
  %1259 = vmatprep.subr.mxu0 0.0
  %1260 = vmatpush1.msra.mxu0 0.0
  %1261 = vmatprep.subr.mxu0 0.0
  %1262 = vmatpush1.msra.mxu0 0.0
  %1263 = vmatprep.mubr.f32.mxu0 %v1191
  %1264 = vmatmul.mubr.f32.gmra.mrb[0].mxu0 %v1132
  %v1265 = vpop.f32.mrb[0].mxu0
  %v1266 = vadd.f32 0.0, %v1265
  %v1267 = vpop.f32.mrb[0].mxu0
  %v1268 = vadd.f32 0.0, %v1267
  %1269 = vmatprep.mubr.f32.mxu0 %v1193
  %1270 = vmatmul.mubr.f32.gmra.mrb[0].mxu0 %v1137
  %v1271 = vpop.f32.mrb[0].mxu0
  %v1272 = vadd.f32 0.0, %v1271
  %v1273 = vpop.f32.mrb[0].mxu0
  %v1274 = vadd.f32 0.0, %v1273
  %1275 = vmatprep.mubr.f32.mxu0 %v1195
  %1276 = vmatmul.mubr.f32.gmra.mrb[0].mxu0 %v1142
  %v1277 = vpop.f32.mrb[0].mxu0
  %v1278 = vadd.f32 0.0, %v1277
  %v1279 = vpop.f32.mrb[0].mxu0
  %v1280 = vadd.f32 0.0, %v1279
  %1281 = vmatprep.mubr.f32.mxu0 %v1197
  %1282 = vmatmul.mubr.f32.gmra.mrb[0].mxu0 %v1147
  %v1283 = vpop.f32.mrb[0].mxu0
  %v1284 = vadd.f32 0.0, %v1283
  %v1285 = vpop.f32.mrb[0].mxu0
  %v1286 = vadd.f32 0.0, %v1285
  %1287 = vdwg.mxu0
  %v1288 = vadd.f32 %v1108, %v1266
  %v1289 = vadd.f32 %v1110, %v1268
  %v1290 = vadd.f32 %v1114, %v1272
  %v1291 = vadd.f32 %v1116, %v1274
  %v1292 = vadd.f32 %v1120, %v1278
  %v1293 = vadd.f32 %v1122, %v1280
  %v1294 = vadd.f32 %v1126, %v1284
  %v1295 = vadd.f32 %v1128, %v1286
  %s1296 = scalar_lea.vmem %s2, 2
  %v1297 = vld [vmem:[%s1296] sm:$0x3]
  %v1299 = vlaneseq
  %v1300 = vshrl.u32 %v1299, 7
  %v1301 = vsub.s32 0, %v1300
  %v1302 = vrot.slane %v1297, %v1301
  %v1303 = vlaneseq
  %v1304 = vshrl.u32 %v1303, 7
  %v1305 = vsub.s32 1, %v1304
  %v1306 = vrot.slane %v1297, %v1305
  %v1309 = vadd.f32 %v1288, %v1302
  %v1310 = vadd.f32 %v1289, %v1306
  %v1311 = vadd.f32 %v1290, %v1302
  %v1312 = vadd.f32 %v1291, %v1306
  %v1313 = vadd.f32 %v1292, %v1302
  %v1314 = vadd.f32 %v1293, %v1306
  %v1315 = vadd.f32 %v1294, %v1302
  %v1316 = vadd.f32 %v1295, %v1306
  %v1317 = vmax.f32 %v1309, 0.0
  %v1318 = vmax.f32 %v1310, 0.0
  %v1319 = vmax.f32 %v1311, 0.0
  %v1320 = vmax.f32 %v1312, 0.0
  %v1321 = vmax.f32 %v1313, 0.0
  %v1322 = vmax.f32 %v1314, 0.0
  %v1323 = vmax.f32 %v1315, 0.0
  %v1324 = vmax.f32 %v1316, 0.0
  %v1325 = vadd.f32 %v1317, %v1319
  %v1326 = vadd.f32 %v1325, %v1321
  %v1327 = vadd.f32 %v1326, %v1323
  %v1328 = vrot.slane %v1327, 4
  %v1329 = vadd.f32 %v1327, %v1328
  %v1330 = vrot.slane %v1329, 2
  %v1331 = vadd.f32 %v1329, %v1330
  %v1332 = vrot.slane %v1331, 1
  %v1333 = vadd.f32 %v1331, %v1332
  %v1334 = vsel %vm181, %v1318, 0.0
  %v1335 = vsel %vm181, %v1320, 0.0
  %v1336 = vadd.f32 %v1334, %v1335
  %v1337 = vsel %vm181, %v1322, 0.0
  %v1338 = vadd.f32 %v1336, %v1337
  %v1339 = vsel %vm181, %v1324, 0.0
  %v1340 = vadd.f32 %v1338, %v1339
  %v1341 = vrot.slane %v1340, 4
  %v1342 = vadd.f32 %v1340, %v1341
  %v1343 = vrot.slane %v1342, 2
  %v1344 = vadd.f32 %v1342, %v1343
  %v1345 = vrot.slane %v1344, 1
  %v1346 = vadd.f32 %v1344, %v1345
  %v1347 = vmul.f32 %v1317, %v1317
  %v1348 = vmul.f32 %v1318, %v1318
  %v1349 = vmul.f32 %v1319, %v1319
  %v1350 = vmul.f32 %v1320, %v1320
  %v1351 = vmul.f32 %v1321, %v1321
  %v1352 = vmul.f32 %v1322, %v1322
  %v1353 = vmul.f32 %v1323, %v1323
  %v1354 = vmul.f32 %v1324, %v1324
  %v1355 = vadd.f32 %v1347, %v1349
  %v1356 = vadd.f32 %v1355, %v1351
  %v1357 = vadd.f32 %v1356, %v1353
  %v1358 = vrot.slane %v1357, 4
  %v1359 = vadd.f32 %v1357, %v1358
  %v1360 = vrot.slane %v1359, 2
  %v1361 = vadd.f32 %v1359, %v1360
  %v1362 = vrot.slane %v1361, 1
  %v1363 = vadd.f32 %v1361, %v1362
  %v1364 = vsel %vm181, %v1348, 0.0
  %v1365 = vsel %vm181, %v1350, 0.0
  %v1366 = vadd.f32 %v1364, %v1365
  %v1367 = vsel %vm181, %v1352, 0.0
  %v1368 = vadd.f32 %v1366, %v1367
  %v1369 = vsel %vm181, %v1354, 0.0
  %v1370 = vadd.f32 %v1368, %v1369
  %v1371 = vrot.slane %v1370, 4
  %v1372 = vadd.f32 %v1370, %v1371
  %v1373 = vrot.slane %v1372, 2
  %v1374 = vadd.f32 %v1372, %v1373
  %v1375 = vrot.slane %v1374, 1
  %v1376 = vadd.f32 %v1374, %v1375
  %v1377 = vsel %vm623, %v1333, %v1363
  %v1378 = vsel %vm623, %v1346, %v1376
  %v1380 = vsel %vm181, %v1378, 0
  %1382 = vmatprep.subr.mxu0 %v24
  %1383 = vmatpush1.msra.mxu0 %v23
  %1384 = vmatprep.subr.mxu0 %v26
  %1385 = vmatpush1.msra.mxu0 %v25
  %1386 = vmatprep.subr.mxu0 %v28
  %1387 = vmatpush1.msra.mxu0 %v27
  %1388 = vmatprep.subr.mxu0 %v30
  %1389 = vmatpush1.msra.mxu0 %v29
  %1390 = vmatprep.subr.mxu0 %v32
  %1391 = vmatpush1.msra.mxu0 %v31
  %1392 = vmatprep.subr.mxu0 %v34
  %1393 = vmatpush1.msra.mxu0 %v33
  %1394 = vmatprep.subr.mxu0 %v36
  %1395 = vmatpush1.msra.mxu0 %v35
  %1396 = vmatprep.subr.mxu0 %v38
  %1397 = vmatpush1.msra.mxu0 %v37
  %1398 = vmatprep.subr.mxu0 %v40
  %1399 = vmatpush1.msra.mxu0 %v39
  %1400 = vmatprep.subr.mxu0 %v42
  %1401 = vmatpush1.msra.mxu0 %v41
  %1402 = vmatprep.subr.mxu0 %v44
  %1403 = vmatpush1.msra.mxu0 %v43
  %1404 = vmatprep.subr.mxu0 %v46
  %1405 = vmatpush1.msra.mxu0 %v45
  %1406 = vmatprep.subr.mxu0 %v48
  %1407 = vmatpush1.msra.mxu0 %v47
  %1408 = vmatprep.subr.mxu0 %v50
  %1409 = vmatpush1.msra.mxu0 %v49
  %1410 = vmatprep.subr.mxu0 %v52
  %1411 = vmatpush1.msra.mxu0 %v51
  %1412 = vmatprep.subr.mxu0 %v54
  %1413 = vmatpush1.msra.mxu0 %v53
  %1414 = vmatprep.subr.mxu0 %v56
  %1415 = vmatpush1.msra.mxu0 %v55
  %1416 = vmatprep.subr.mxu0 %v58
  %1417 = vmatpush1.msra.mxu0 %v57
  %1418 = vmatprep.subr.mxu0 0.0
  %1419 = vmatpush1.msra.mxu0 0.0
  %1420 = vmatprep.subr.mxu0 0.0
  %1421 = vmatpush1.msra.mxu0 0.0
  %1422 = vmatprep.subr.mxu0 0.0
  %1423 = vmatpush1.msra.mxu0 0.0
  %1424 = vmatprep.subr.mxu0 0.0
  %1425 = vmatpush1.msra.mxu0 0.0
  %1426 = vmatprep.subr.mxu0 0.0
  %1427 = vmatpush1.msra.mxu0 0.0
  %1428 = vmatprep.subr.mxu0 0.0
  %1429 = vmatpush1.msra.mxu0 0.0
  %1430 = vmatprep.subr.mxu0 0.0
  %1431 = vmatpush1.msra.mxu0 0.0
  %1432 = vmatprep.subr.mxu0 0.0
  %1433 = vmatpush1.msra.mxu0 0.0
  %1434 = vmatprep.subr.mxu0 0.0
  %1435 = vmatpush1.msra.mxu0 0.0
  %1436 = vmatprep.subr.mxu0 0.0
  %1437 = vmatpush1.msra.mxu0 0.0
  %1438 = vmatprep.subr.mxu0 0.0
  %1439 = vmatpush1.msra.mxu0 0.0
  %1440 = vmatprep.subr.mxu0 0.0
  %1441 = vmatpush1.msra.mxu0 0.0
  %1442 = vmatprep.subr.mxu0 0.0
  %1443 = vmatpush1.msra.mxu0 0.0
  %1444 = vmatprep.subr.mxu0 0.0
  %1445 = vmatpush1.msra.mxu0 0.0
  %1446 = vmatprep.mubr.f32.mxu0 %v1380
  %1447 = vmatmul.mubr.f32.gmra.mrb[0].mxu0 %v1377
  %v1448 = vpop.f32.mrb[0].mxu0
  %v1449 = vadd.f32 0.0, %v1448
  %v1450 = vpop.f32.mrb[0].mxu0
  %v1451 = vadd.f32 0.0, %v1450
  %1452 = vdwg.mxu0
  %v1453 = vmul.f32 %v1449, 0.001953125
  %v1454 = vmul.f32 %v1451, 0.001953125
  %v1455 = vmul.f32 %v1453, %v1453
  %v1456 = vmul.f32 %v1454, %v1454
  %v1459 = vrot.slane %v1455, 7
  %v1460 = vrot.slane %v1456, 7
  %v1463 = vsub.f32 %v1453, %v1459
  %v1464 = vsub.f32 %v1454, %v1460
  %s1465 = scalar_lea.vmem %s3, 2
  %v1466 = vld [vmem:[%s1465] sm:$0x3]
  %v1467 = vadd.f32 %v1463, 1e-05
  %v1468 = vadd.f32 %v1464, 1e-05
  %v1469 = vrsqrt.pop %v1467
  %v1470 = vrsqrt.pop %v1468
  %v1473 = vcombine.low %v1469, %v1470
  %v1475 = vunpack.c.l.s4 1966171168
  %v1476 = vunpack.c.0.s8 %v1475
  %v1477 = vlaneseq
  %v1478 = vshrl.u32 %v1477, 7
  %v1479 = vsub.s32 %v1476, %v1478
  %v1480 = vrot.slane %v1473, %v1479
  %v1481 = vcombine.high %v1480, %v1480
  %v1483 = vunpack.c.l.s4 1966171168
  %v1484 = vunpack.c.0.s8 %v1483
  %v1485 = vlaneseq
  %v1486 = vshrl.u32 %v1485, 7
  %v1487 = vsub.s32 %v1484, %v1486
  %v1488 = vrot.slane %v1481, %v1487
  %v1490 = vmul.f32 %v1466, %v1488
  %v1491 = vlaneseq
  %v1492 = vshrl.u32 %v1491, 7
  %v1493 = vsub.s32 0, %v1492
  %v1494 = vrot.slane %v1453, %v1493
  %v1495 = vlaneseq
  %v1496 = vshrl.u32 %v1495, 7
  %v1497 = vsub.s32 0, %v1496
  %v1498 = vrot.slane %v1454, %v1497
  %v1499 = vsub.f32 %v1317, %v1494
  %v1500 = vsub.f32 %v1318, %v1498
  %v1501 = vsub.f32 %v1319, %v1494
  %v1502 = vsub.f32 %v1320, %v1498
  %v1503 = vsub.f32 %v1321, %v1494
  %v1504 = vsub.f32 %v1322, %v1498
  %v1505 = vsub.f32 %v1323, %v1494
  %v1506 = vsub.f32 %v1324, %v1498
  %v1508 = vlaneseq
  %v1509 = vshrl.u32 %v1508, 7
  %v1510 = vsub.s32 0, %v1509
  %v1511 = vrot.slane %v1490, %v1510
  %v1512 = vlaneseq
  %v1513 = vshrl.u32 %v1512, 7
  %v1514 = vsub.s32 1, %v1513
  %v1515 = vrot.slane %v1490, %v1514
  %v1518 = vmul.f32 %v1499, %v1511
  %v1519 = vmul.f32 %v1500, %v1515
  %v1520 = vmul.f32 %v1501, %v1511
  %v1521 = vmul.f32 %v1502, %v1515
  %v1522 = vmul.f32 %v1503, %v1511
  %v1523 = vmul.f32 %v1504, %v1515
  %v1524 = vmul.f32 %v1505, %v1511
  %v1525 = vmul.f32 %v1506, %v1515
  %s1526 = scalar_lea.vmem %s4, 2
  %v1527 = vld [vmem:[%s1526] sm:$0x3]
  %v1529 = vlaneseq
  %v1530 = vshrl.u32 %v1529, 7
  %v1531 = vsub.s32 0, %v1530
  %v1532 = vrot.slane %v1527, %v1531
  %v1533 = vlaneseq
  %v1534 = vshrl.u32 %v1533, 7
  %v1535 = vsub.s32 1, %v1534
  %v1536 = vrot.slane %v1527, %v1535
  %v1539 = vadd.f32 %v1518, %v1532
  %v1540 = vadd.f32 %v1519, %v1536
  %v1541 = vadd.f32 %v1520, %v1532
  %v1542 = vadd.f32 %v1521, %v1536
  %v1543 = vadd.f32 %v1522, %v1532
  %v1544 = vadd.f32 %v1523, %v1536
  %v1545 = vadd.f32 %v1524, %v1532
  %v1546 = vadd.f32 %v1525, %v1536
  %v1555 = vrot.slane %v1539, 7
  %v1556 = vrot.slane %v1540, 7
  %v1557 = vrot.slane %v1541, 7
  %v1558 = vsel %vm623, %v1555, %v1557
  %v1559 = vrot.slane %v1542, 7
  %v1560 = vsel %vm623, %v1556, %v1559
  %v1561 = vrot.slane %v1543, 7
  %v1562 = vrot.slane %v1544, 7
  %v1563 = vrot.slane %v1545, 7
  %v1564 = vsel %vm623, %v1561, %v1563
  %v1565 = vrot.slane %v1546, 7
  %v1566 = vsel %vm623, %v1562, %v1565
  %v1577 = vsel %vm623, 0.0, %v1555
  %v1578 = vsel %vm623, 0.0, %v1556
  %v1579 = vsel %vm623, 0.0, %v1561
  %v1580 = vsel %vm623, 0.0, %v1562
  %v1581 = vsel %vm623, %v1557, 0.0
  %v1582 = vsel %vm623, %v1559, 0.0
  %v1583 = vsel %vm623, %v1563, 0.0
  %v1584 = vsel %vm623, %v1565, 0.0
  %s1585 = scalar_lea.vmem %s1, 1728
  %v1586 = vld [vmem:[%s1585] sm:$0xff]
  %v1587 = vld [vmem:[%s1585 + $0x8] sm:$0xff]
  %v1588 = vld [vmem:[%s1585 + $0x10] sm:$0xff]
  %v1589 = vld [vmem:[%s1585 + $0x18] sm:$0xff]
  %v1590 = vld [vmem:[%s1585 + $0x20] sm:$0xff]
  %v1591 = vld [vmem:[%s1585 + $0x28] sm:$0xff]
  %v1592 = vld [vmem:[%s1585 + $0x30] sm:$0xff]
  %v1593 = vld [vmem:[%s1585 + $0x38] sm:$0xff]
  %v1594 = vld [vmem:[%s1585 + $0x40] sm:$0xff]
  %v1595 = vld [vmem:[%s1585 + $0x48] sm:$0xff]
  %v1596 = vld [vmem:[%s1585 + $0x50] sm:$0xff]
  %v1597 = vld [vmem:[%s1585 + $0x58] sm:$0xff]
  %v1598 = vld [vmem:[%s1585 + $0x60] sm:$0xff]
  %v1599 = vld [vmem:[%s1585 + $0x68] sm:$0xff]
  %v1600 = vld [vmem:[%s1585 + $0x70] sm:$0xff]
  %v1601 = vld [vmem:[%s1585 + $0x78] sm:$0xff]
  %v1602 = vld [vmem:[%s1585 + $0x80] sm:$0xff]
  %v1603 = vld [vmem:[%s1585 + $0x88] sm:$0xff]
  %v1604 = vld [vmem:[%s1585 + $0x90] sm:$0xff]
  %v1605 = vld [vmem:[%s1585 + $0x98] sm:$0xff]
  %v1606 = vld [vmem:[%s1585 + $0xa0] sm:$0xff]
  %v1607 = vld [vmem:[%s1585 + $0xa8] sm:$0xff]
  %v1608 = vld [vmem:[%s1585 + $0xb0] sm:$0xff]
  %v1609 = vld [vmem:[%s1585 + $0xb8] sm:$0xff]
  %v1610 = vld [vmem:[%s1585 + $0xc0] sm:$0xff]
  %v1611 = vld [vmem:[%s1585 + $0xc8] sm:$0xff]
  %v1612 = vld [vmem:[%s1585 + $0xd0] sm:$0xff]
  %v1613 = vld [vmem:[%s1585 + $0xd8] sm:$0xff]
  %v1614 = vld [vmem:[%s1585 + $0xe0] sm:$0xff]
  %v1615 = vld [vmem:[%s1585 + $0xe8] sm:$0xff]
  %v1616 = vld [vmem:[%s1585 + $0xf0] sm:$0xff]
  %v1617 = vld [vmem:[%s1585 + $0xf8] sm:$0xff]
  %v1618 = vld [vmem:[%s1585 + $0x100] sm:$0xff]
  %v1619 = vld [vmem:[%s1585 + $0x108] sm:$0xff]
  %v1620 = vld [vmem:[%s1585 + $0x110] sm:$0xff]
  %v1621 = vld [vmem:[%s1585 + $0x118] sm:$0xff]
  %v1630 = vrot.slane %v1577, 1
  %v1631 = vrot.slane %v1558, 1
  %v1632 = vsel %vm119, %v1630, %v1631
  %v1633 = vrot.slane %v1578, 1
  %v1634 = vrot.slane %v1560, 1
  %v1635 = vsel %vm119, %v1633, %v1634
  %v1636 = vrot.slane %v1581, 1
  %v1637 = vsel %vm119, %v1631, %v1636
  %v1638 = vrot.slane %v1582, 1
  %v1639 = vsel %vm119, %v1634, %v1638
  %v1640 = vrot.slane %v1579, 1
  %v1641 = vrot.slane %v1564, 1
  %v1642 = vsel %vm119, %v1640, %v1641
  %v1643 = vrot.slane %v1580, 1
  %v1644 = vrot.slane %v1566, 1
  %v1645 = vsel %vm119, %v1643, %v1644
  %v1646 = vrot.slane %v1583, 1
  %v1647 = vsel %vm119, %v1641, %v1646
  %v1648 = vrot.slane %v1584, 1
  %v1649 = vsel %vm119, %v1644, %v1648
  %s1654 = scalar_lea.vmem %s1, 2016
  %v1655 = vld [vmem:[%s1654] sm:$0xff]
  %v1656 = vld [vmem:[%s1654 + $0x8] sm:$0xff]
  %v1657 = vld [vmem:[%s1654 + $0x10] sm:$0xff]
  %v1658 = vld [vmem:[%s1654 + $0x18] sm:$0xff]
  %v1659 = vld [vmem:[%s1654 + $0x20] sm:$0xff]
  %v1660 = vld [vmem:[%s1654 + $0x28] sm:$0xff]
  %v1661 = vld [vmem:[%s1654 + $0x30] sm:$0xff]
  %v1662 = vld [vmem:[%s1654 + $0x38] sm:$0xff]
  %v1663 = vld [vmem:[%s1654 + $0x40] sm:$0xff]
  %v1664 = vld [vmem:[%s1654 + $0x48] sm:$0xff]
  %v1665 = vld [vmem:[%s1654 + $0x50] sm:$0xff]
  %v1666 = vld [vmem:[%s1654 + $0x58] sm:$0xff]
  %v1667 = vld [vmem:[%s1654 + $0x60] sm:$0xff]
  %v1668 = vld [vmem:[%s1654 + $0x68] sm:$0xff]
  %v1669 = vld [vmem:[%s1654 + $0x70] sm:$0xff]
  %v1670 = vld [vmem:[%s1654 + $0x78] sm:$0xff]
  %v1671 = vld [vmem:[%s1654 + $0x80] sm:$0xff]
  %v1672 = vld [vmem:[%s1654 + $0x88] sm:$0xff]
  %v1673 = vld [vmem:[%s1654 + $0x90] sm:$0xff]
  %v1674 = vld [vmem:[%s1654 + $0x98] sm:$0xff]
  %v1675 = vld [vmem:[%s1654 + $0xa0] sm:$0xff]
  %v1676 = vld [vmem:[%s1654 + $0xa8] sm:$0xff]
  %v1677 = vld [vmem:[%s1654 + $0xb0] sm:$0xff]
  %v1678 = vld [vmem:[%s1654 + $0xb8] sm:$0xff]
  %v1679 = vld [vmem:[%s1654 + $0xc0] sm:$0xff]
  %v1680 = vld [vmem:[%s1654 + $0xc8] sm:$0xff]
  %v1681 = vld [vmem:[%s1654 + $0xd0] sm:$0xff]
  %v1682 = vld [vmem:[%s1654 + $0xd8] sm:$0xff]
  %v1683 = vld [vmem:[%s1654 + $0xe0] sm:$0xff]
  %v1684 = vld [vmem:[%s1654 + $0xe8] sm:$0xff]
  %v1685 = vld [vmem:[%s1654 + $0xf0] sm:$0xff]
  %v1686 = vld [vmem:[%s1654 + $0xf8] sm:$0xff]
  %v1687 = vld [vmem:[%s1654 + $0x100] sm:$0xff]
  %v1688 = vld [vmem:[%s1654 + $0x108] sm:$0xff]
  %v1689 = vld [vmem:[%s1654 + $0x110] sm:$0xff]
  %v1690 = vld [vmem:[%s1654 + $0x118] sm:$0xff]
  %v1691 = vsel %vm181, %v1635, 0
  %v1693 = vsel %vm181, %v1639, 0
  %v1695 = vsel %vm181, %v1645, 0
  %v1697 = vsel %vm181, %v1649, 0
  %1699 = vmatprep.subr.mxu0 %v1656
  %1700 = vmatpush1.msra.mxu0 %v1655
  %1701 = vmatprep.subr.mxu0 %v1658
  %1702 = vmatpush1.msra.mxu0 %v1657
  %1703 = vmatprep.subr.mxu0 %v1660
  %1704 = vmatpush1.msra.mxu0 %v1659
  %1705 = vmatprep.subr.mxu0 %v1662
  %1706 = vmatpush1.msra.mxu0 %v1661
  %1707 = vmatprep.subr.mxu0 %v1664
  %1708 = vmatpush1.msra.mxu0 %v1663
  %1709 = vmatprep.subr.mxu0 %v1666
  %1710 = vmatpush1.msra.mxu0 %v1665
  %1711 = vmatprep.subr.mxu0 %v1668
  %1712 = vmatpush1.msra.mxu0 %v1667
  %1713 = vmatprep.subr.mxu0 %v1670
  %1714 = vmatpush1.msra.mxu0 %v1669
  %1715 = vmatprep.subr.mxu0 %v1672
  %1716 = vmatpush1.msra.mxu0 %v1671
  %1717 = vmatprep.subr.mxu0 %v1674
  %1718 = vmatpush1.msra.mxu0 %v1673
  %1719 = vmatprep.subr.mxu0 %v1676
  %1720 = vmatpush1.msra.mxu0 %v1675
  %1721 = vmatprep.subr.mxu0 %v1678
  %1722 = vmatpush1.msra.mxu0 %v1677
  %1723 = vmatprep.subr.mxu0 %v1680
  %1724 = vmatpush1.msra.mxu0 %v1679
  %1725 = vmatprep.subr.mxu0 %v1682
  %1726 = vmatpush1.msra.mxu0 %v1681
  %1727 = vmatprep.subr.mxu0 %v1684
  %1728 = vmatpush1.msra.mxu0 %v1683
  %1729 = vmatprep.subr.mxu0 %v1686
  %1730 = vmatpush1.msra.mxu0 %v1685
  %1731 = vmatprep.subr.mxu0 %v1688
  %1732 = vmatpush1.msra.mxu0 %v1687
  %1733 = vmatprep.subr.mxu0 %v1690
  %1734 = vmatpush1.msra.mxu0 %v1689
  %1735 = vmatprep.subr.mxu0 0.0
  %1736 = vmatpush1.msra.mxu0 0.0
  %1737 = vmatprep.subr.mxu0 0.0
  %1738 = vmatpush1.msra.mxu0 0.0
  %1739 = vmatprep.subr.mxu0 0.0
  %1740 = vmatpush1.msra.mxu0 0.0
  %1741 = vmatprep.subr.mxu0 0.0
  %1742 = vmatpush1.msra.mxu0 0.0
  %1743 = vmatprep.subr.mxu0 0.0
  %1744 = vmatpush1.msra.mxu0 0.0
  %1745 = vmatprep.subr.mxu0 0.0
  %1746 = vmatpush1.msra.mxu0 0.0
  %1747 = vmatprep.subr.mxu0 0.0
  %1748 = vmatpush1.msra.mxu0 0.0
  %1749 = vmatprep.subr.mxu0 0.0
  %1750 = vmatpush1.msra.mxu0 0.0
  %1751 = vmatprep.subr.mxu0 0.0
  %1752 = vmatpush1.msra.mxu0 0.0
  %1753 = vmatprep.subr.mxu0 0.0
  %1754 = vmatpush1.msra.mxu0 0.0
  %1755 = vmatprep.subr.mxu0 0.0
  %1756 = vmatpush1.msra.mxu0 0.0
  %1757 = vmatprep.subr.mxu0 0.0
  %1758 = vmatpush1.msra.mxu0 0.0
  %1759 = vmatprep.subr.mxu0 0.0
  %1760 = vmatpush1.msra.mxu0 0.0
  %1761 = vmatprep.subr.mxu0 0.0
  %1762 = vmatpush1.msra.mxu0 0.0
  %1763 = vmatprep.mubr.f32.mxu0 %v1691
  %1764 = vmatmul.mubr.f32.gmra.mrb[0].mxu0 %v1632
  %v1765 = vpop.f32.mrb[0].mxu0
  %v1766 = vadd.f32 0.0, %v1765
  %v1767 = vpop.f32.mrb[0].mxu0
  %v1768 = vadd.f32 0.0, %v1767
  %1769 = vmatprep.mubr.f32.mxu0 %v1693
  %1770 = vmatmul.mubr.f32.gmra.mrb[0].mxu0 %v1637
  %v1771 = vpop.f32.mrb[0].mxu0
  %v1772 = vadd.f32 0.0, %v1771
  %v1773 = vpop.f32.mrb[0].mxu0
  %v1774 = vadd.f32 0.0, %v1773
  %1775 = vmatprep.mubr.f32.mxu0 %v1695
  %1776 = vmatmul.mubr.f32.gmra.mrb[0].mxu0 %v1642
  %v1777 = vpop.f32.mrb[0].mxu0
  %v1778 = vadd.f32 0.0, %v1777
  %v1779 = vpop.f32.mrb[0].mxu0
  %v1780 = vadd.f32 0.0, %v1779
  %1781 = vmatprep.mubr.f32.mxu0 %v1697
  %1782 = vmatmul.mubr.f32.gmra.mrb[0].mxu0 %v1647
  %v1783 = vpop.f32.mrb[0].mxu0
  %v1784 = vadd.f32 0.0, %v1783
  %v1785 = vpop.f32.mrb[0].mxu0
  %v1786 = vadd.f32 0.0, %v1785
  %1787 = vdwg.mxu0
  %v1788 = vsel %vm181, %v1578, 0
  %v1790 = vsel %vm181, %v1560, 0
  %v1792 = vsel %vm181, %v1580, 0
  %v1794 = vsel %vm181, %v1566, 0
  %1796 = vmatprep.subr.mxu0 %v1587
  %1797 = vmatpush1.msra.mxu0 %v1586
  %1798 = vmatprep.subr.mxu0 %v1589
  %1799 = vmatpush1.msra.mxu0 %v1588
  %1800 = vmatprep.subr.mxu0 %v1591
  %1801 = vmatpush1.msra.mxu0 %v1590
  %1802 = vmatprep.subr.mxu0 %v1593
  %1803 = vmatpush1.msra.mxu0 %v1592
  %1804 = vmatprep.subr.mxu0 %v1595
  %1805 = vmatpush1.msra.mxu0 %v1594
  %1806 = vmatprep.subr.mxu0 %v1597
  %1807 = vmatpush1.msra.mxu0 %v1596
  %1808 = vmatprep.subr.mxu0 %v1599
  %1809 = vmatpush1.msra.mxu0 %v1598
  %1810 = vmatprep.subr.mxu0 %v1601
  %1811 = vmatpush1.msra.mxu0 %v1600
  %1812 = vmatprep.subr.mxu0 %v1603
  %1813 = vmatpush1.msra.mxu0 %v1602
  %1814 = vmatprep.subr.mxu0 %v1605
  %1815 = vmatpush1.msra.mxu0 %v1604
  %1816 = vmatprep.subr.mxu0 %v1607
  %1817 = vmatpush1.msra.mxu0 %v1606
  %1818 = vmatprep.subr.mxu0 %v1609
  %1819 = vmatpush1.msra.mxu0 %v1608
  %1820 = vmatprep.subr.mxu0 %v1611
  %1821 = vmatpush1.msra.mxu0 %v1610
  %1822 = vmatprep.subr.mxu0 %v1613
  %1823 = vmatpush1.msra.mxu0 %v1612
  %1824 = vmatprep.subr.mxu0 %v1615
  %1825 = vmatpush1.msra.mxu0 %v1614
  %1826 = vmatprep.subr.mxu0 %v1617
  %1827 = vmatpush1.msra.mxu0 %v1616
  %1828 = vmatprep.subr.mxu0 %v1619
  %1829 = vmatpush1.msra.mxu0 %v1618
  %1830 = vmatprep.subr.mxu0 %v1621
  %1831 = vmatpush1.msra.mxu0 %v1620
  %1832 = vmatprep.subr.mxu0 0.0
  %1833 = vmatpush1.msra.mxu0 0.0
  %1834 = vmatprep.subr.mxu0 0.0
  %1835 = vmatpush1.msra.mxu0 0.0
  %1836 = vmatprep.subr.mxu0 0.0
  %1837 = vmatpush1.msra.mxu0 0.0
  %1838 = vmatprep.subr.mxu0 0.0
  %1839 = vmatpush1.msra.mxu0 0.0
  %1840 = vmatprep.subr.mxu0 0.0
  %1841 = vmatpush1.msra.mxu0 0.0
  %1842 = vmatprep.subr.mxu0 0.0
  %1843 = vmatpush1.msra.mxu0 0.0
  %1844 = vmatprep.subr.mxu0 0.0
  %1845 = vmatpush1.msra.mxu0 0.0
  %1846 = vmatprep.subr.mxu0 0.0
  %1847 = vmatpush1.msra.mxu0 0.0
  %1848 = vmatprep.subr.mxu0 0.0
  %1849 = vmatpush1.msra.mxu0 0.0
  %1850 = vmatprep.subr.mxu0 0.0
  %1851 = vmatpush1.msra.mxu0 0.0
  %1852 = vmatprep.subr.mxu0 0.0
  %1853 = vmatpush1.msra.mxu0 0.0
  %1854 = vmatprep.subr.mxu0 0.0
  %1855 = vmatpush1.msra.mxu0 0.0
  %1856 = vmatprep.subr.mxu0 0.0
  %1857 = vmatpush1.msra.mxu0 0.0
  %1858 = vmatprep.subr.mxu0 0.0
  %1859 = vmatpush1.msra.mxu0 0.0
  %1860 = vmatprep.mubr.f32.mxu0 %v1788
  %1861 = vmatmul.mubr.f32.gmra.mrb[0].mxu0 %v1577
  %v1862 = vpop.f32.mrb[0].mxu0
  %v1863 = vadd.f32 %v1766, %v1862
  %v1864 = vpop.f32.mrb[0].mxu0
  %v1865 = vadd.f32 %v1768, %v1864
  %1866 = vmatprep.mubr.f32.mxu0 %v1790
  %1867 = vmatmul.mubr.f32.gmra.mrb[0].mxu0 %v1558
  %v1868 = vpop.f32.mrb[0].mxu0
  %v1869 = vadd.f32 %v1772, %v1868
  %v1870 = vpop.f32.mrb[0].mxu0
  %v1871 = vadd.f32 %v1774, %v1870
  %1872 = vmatprep.mubr.f32.mxu0 %v1792
  %1873 = vmatmul.mubr.f32.gmra.mrb[0].mxu0 %v1579
  %v1874 = vpop.f32.mrb[0].mxu0
  %v1875 = vadd.f32 %v1778, %v1874
  %v1876 = vpop.f32.mrb[0].mxu0
  %v1877 = vadd.f32 %v1780, %v1876
  %1878 = vmatprep.mubr.f32.mxu0 %v1794
  %1879 = vmatmul.mubr.f32.gmra.mrb[0].mxu0 %v1564
  %v1880 = vpop.f32.mrb[0].mxu0
  %v1881 = vadd.f32 %v1784, %v1880
  %v1882 = vpop.f32.mrb[0].mxu0
  %v1883 = vadd.f32 %v1786, %v1882
  %1884 = vdwg.mxu0
  %v1885 = vrot.slane %v1577, 2
  %v1886 = vrot.slane %v1558, 2
  %v1887 = vsel %vm376, %v1885, %v1886
  %v1888 = vrot.slane %v1578, 2
  %v1889 = vrot.slane %v1560, 2
  %v1890 = vsel %vm376, %v1888, %v1889
  %v1891 = vrot.slane %v1581, 2
  %v1892 = vsel %vm376, %v1886, %v1891
  %v1893 = vrot.slane %v1582, 2
  %v1894 = vsel %vm376, %v1889, %v1893
  %v1895 = vrot.slane %v1579, 2
  %v1896 = vrot.slane %v1564, 2
  %v1897 = vsel %vm376, %v1895, %v1896
  %v1898 = vrot.slane %v1580, 2
  %v1899 = vrot.slane %v1566, 2
  %v1900 = vsel %vm376, %v1898, %v1899
  %v1901 = vrot.slane %v1583, 2
  %v1902 = vsel %vm376, %v1896, %v1901
  %v1903 = vrot.slane %v1584, 2
  %v1904 = vsel %vm376, %v1899, %v1903
  %s1909 = scalar_lea.vmem %s1, 2304
  %v1910 = vld [vmem:[%s1909] sm:$0xff]
  %v1911 = vld [vmem:[%s1909 + $0x8] sm:$0xff]
  %v1912 = vld [vmem:[%s1909 + $0x10] sm:$0xff]
  %v1913 = vld [vmem:[%s1909 + $0x18] sm:$0xff]
  %v1914 = vld [vmem:[%s1909 + $0x20] sm:$0xff]
  %v1915 = vld [vmem:[%s1909 + $0x28] sm:$0xff]
  %v1916 = vld [vmem:[%s1909 + $0x30] sm:$0xff]
  %v1917 = vld [vmem:[%s1909 + $0x38] sm:$0xff]
  %v1918 = vld [vmem:[%s1909 + $0x40] sm:$0xff]
  %v1919 = vld [vmem:[%s1909 + $0x48] sm:$0xff]
  %v1920 = vld [vmem:[%s1909 + $0x50] sm:$0xff]
  %v1921 = vld [vmem:[%s1909 + $0x58] sm:$0xff]
  %v1922 = vld [vmem:[%s1909 + $0x60] sm:$0xff]
  %v1923 = vld [vmem:[%s1909 + $0x68] sm:$0xff]
  %v1924 = vld [vmem:[%s1909 + $0x70] sm:$0xff]
  %v1925 = vld [vmem:[%s1909 + $0x78] sm:$0xff]
  %v1926 = vld [vmem:[%s1909 + $0x80] sm:$0xff]
  %v1927 = vld [vmem:[%s1909 + $0x88] sm:$0xff]
  %v1928 = vld [vmem:[%s1909 + $0x90] sm:$0xff]
  %v1929 = vld [vmem:[%s1909 + $0x98] sm:$0xff]
  %v1930 = vld [vmem:[%s1909 + $0xa0] sm:$0xff]
  %v1931 = vld [vmem:[%s1909 + $0xa8] sm:$0xff]
  %v1932 = vld [vmem:[%s1909 + $0xb0] sm:$0xff]
  %v1933 = vld [vmem:[%s1909 + $0xb8] sm:$0xff]
  %v1934 = vld [vmem:[%s1909 + $0xc0] sm:$0xff]
  %v1935 = vld [vmem:[%s1909 + $0xc8] sm:$0xff]
  %v1936 = vld [vmem:[%s1909 + $0xd0] sm:$0xff]
  %v1937 = vld [vmem:[%s1909 + $0xd8] sm:$0xff]
  %v1938 = vld [vmem:[%s1909 + $0xe0] sm:$0xff]
  %v1939 = vld [vmem:[%s1909 + $0xe8] sm:$0xff]
  %v1940 = vld [vmem:[%s1909 + $0xf0] sm:$0xff]
  %v1941 = vld [vmem:[%s1909 + $0xf8] sm:$0xff]
  %v1942 = vld [vmem:[%s1909 + $0x100] sm:$0xff]
  %v1943 = vld [vmem:[%s1909 + $0x108] sm:$0xff]
  %v1944 = vld [vmem:[%s1909 + $0x110] sm:$0xff]
  %v1945 = vld [vmem:[%s1909 + $0x118] sm:$0xff]
  %v1946 = vsel %vm181, %v1890, 0
  %v1948 = vsel %vm181, %v1894, 0
  %v1950 = vsel %vm181, %v1900, 0
  %v1952 = vsel %vm181, %v1904, 0
  %1954 = vmatprep.subr.mxu0 %v1911
  %1955 = vmatpush1.msra.mxu0 %v1910
  %1956 = vmatprep.subr.mxu0 %v1913
  %1957 = vmatpush1.msra.mxu0 %v1912
  %1958 = vmatprep.subr.mxu0 %v1915
  %1959 = vmatpush1.msra.mxu0 %v1914
  %1960 = vmatprep.subr.mxu0 %v1917
  %1961 = vmatpush1.msra.mxu0 %v1916
  %1962 = vmatprep.subr.mxu0 %v1919
  %1963 = vmatpush1.msra.mxu0 %v1918
  %1964 = vmatprep.subr.mxu0 %v1921
  %1965 = vmatpush1.msra.mxu0 %v1920
  %1966 = vmatprep.subr.mxu0 %v1923
  %1967 = vmatpush1.msra.mxu0 %v1922
  %1968 = vmatprep.subr.mxu0 %v1925
  %1969 = vmatpush1.msra.mxu0 %v1924
  %1970 = vmatprep.subr.mxu0 %v1927
  %1971 = vmatpush1.msra.mxu0 %v1926
  %1972 = vmatprep.subr.mxu0 %v1929
  %1973 = vmatpush1.msra.mxu0 %v1928
  %1974 = vmatprep.subr.mxu0 %v1931
  %1975 = vmatpush1.msra.mxu0 %v1930
  %1976 = vmatprep.subr.mxu0 %v1933
  %1977 = vmatpush1.msra.mxu0 %v1932
  %1978 = vmatprep.subr.mxu0 %v1935
  %1979 = vmatpush1.msra.mxu0 %v1934
  %1980 = vmatprep.subr.mxu0 %v1937
  %1981 = vmatpush1.msra.mxu0 %v1936
  %1982 = vmatprep.subr.mxu0 %v1939
  %1983 = vmatpush1.msra.mxu0 %v1938
  %1984 = vmatprep.subr.mxu0 %v1941
  %1985 = vmatpush1.msra.mxu0 %v1940
  %1986 = vmatprep.subr.mxu0 %v1943
  %1987 = vmatpush1.msra.mxu0 %v1942
  %1988 = vmatprep.subr.mxu0 %v1945
  %1989 = vmatpush1.msra.mxu0 %v1944
  %1990 = vmatprep.subr.mxu0 0.0
  %1991 = vmatpush1.msra.mxu0 0.0
  %1992 = vmatprep.subr.mxu0 0.0
  %1993 = vmatpush1.msra.mxu0 0.0
  %1994 = vmatprep.subr.mxu0 0.0
  %1995 = vmatpush1.msra.mxu0 0.0
  %1996 = vmatprep.subr.mxu0 0.0
  %1997 = vmatpush1.msra.mxu0 0.0
  %1998 = vmatprep.subr.mxu0 0.0
  %1999 = vmatpush1.msra.mxu0 0.0
  %2000 = vmatprep.subr.mxu0 0.0
  %2001 = vmatpush1.msra.mxu0 0.0
  %2002 = vmatprep.subr.mxu0 0.0
  %2003 = vmatpush1.msra.mxu0 0.0
  %2004 = vmatprep.subr.mxu0 0.0
  %2005 = vmatpush1.msra.mxu0 0.0
  %2006 = vmatprep.subr.mxu0 0.0
  %2007 = vmatpush1.msra.mxu0 0.0
  %2008 = vmatprep.subr.mxu0 0.0
  %2009 = vmatpush1.msra.mxu0 0.0
  %2010 = vmatprep.subr.mxu0 0.0
  %2011 = vmatpush1.msra.mxu0 0.0
  %2012 = vmatprep.subr.mxu0 0.0
  %2013 = vmatpush1.msra.mxu0 0.0
  %2014 = vmatprep.subr.mxu0 0.0
  %2015 = vmatpush1.msra.mxu0 0.0
  %2016 = vmatprep.subr.mxu0 0.0
  %2017 = vmatpush1.msra.mxu0 0.0
  %2018 = vmatprep.mubr.f32.mxu0 %v1946
  %2019 = vmatmul.mubr.f32.gmra.mrb[0].mxu0 %v1887
  %v2020 = vpop.f32.mrb[0].mxu0
  %v2021 = vadd.f32 0.0, %v2020
  %v2022 = vpop.f32.mrb[0].mxu0
  %v2023 = vadd.f32 0.0, %v2022
  %2024 = vmatprep.mubr.f32.mxu0 %v1948
  %2025 = vmatmul.mubr.f32.gmra.mrb[0].mxu0 %v1892
  %v2026 = vpop.f32.mrb[0].mxu0
  %v2027 = vadd.f32 0.0, %v2026
  %v2028 = vpop.f32.mrb[0].mxu0
  %v2029 = vadd.f32 0.0, %v2028
  %2030 = vmatprep.mubr.f32.mxu0 %v1950
  %2031 = vmatmul.mubr.f32.gmra.mrb[0].mxu0 %v1897
  %v2032 = vpop.f32.mrb[0].mxu0
  %v2033 = vadd.f32 0.0, %v2032
  %v2034 = vpop.f32.mrb[0].mxu0
  %v2035 = vadd.f32 0.0, %v2034
  %2036 = vmatprep.mubr.f32.mxu0 %v1952
  %2037 = vmatmul.mubr.f32.gmra.mrb[0].mxu0 %v1902
  %v2038 = vpop.f32.mrb[0].mxu0
  %v2039 = vadd.f32 0.0, %v2038
  %v2040 = vpop.f32.mrb[0].mxu0
  %v2041 = vadd.f32 0.0, %v2040
  %2042 = vdwg.mxu0
  %v2043 = vadd.f32 %v1863, %v2021
  %v2044 = vadd.f32 %v1865, %v2023
  %v2045 = vadd.f32 %v1869, %v2027
  %v2046 = vadd.f32 %v1871, %v2029
  %v2047 = vadd.f32 %v1875, %v2033
  %v2048 = vadd.f32 %v1877, %v2035
  %v2049 = vadd.f32 %v1881, %v2039
  %v2050 = vadd.f32 %v1883, %v2041
  %s2051 = scalar_lea.vmem %s2, 4
  %v2052 = vld [vmem:[%s2051] sm:$0x3]
  %v2054 = vlaneseq
  %v2055 = vshrl.u32 %v2054, 7
  %v2056 = vsub.s32 0, %v2055
  %v2057 = vrot.slane %v2052, %v2056
  %v2058 = vlaneseq
  %v2059 = vshrl.u32 %v2058, 7
  %v2060 = vsub.s32 1, %v2059
  %v2061 = vrot.slane %v2052, %v2060
  %v2064 = vadd.f32 %v2043, %v2057
  %v2065 = vadd.f32 %v2044, %v2061
  %v2066 = vadd.f32 %v2045, %v2057
  %v2067 = vadd.f32 %v2046, %v2061
  %v2068 = vadd.f32 %v2047, %v2057
  %v2069 = vadd.f32 %v2048, %v2061
  %v2070 = vadd.f32 %v2049, %v2057
  %v2071 = vadd.f32 %v2050, %v2061
  %v2072 = vmax.f32 %v2064, 0.0
  %v2073 = vmax.f32 %v2065, 0.0
  %v2074 = vmax.f32 %v2066, 0.0
  %v2075 = vmax.f32 %v2067, 0.0
  %v2076 = vmax.f32 %v2068, 0.0
  %v2077 = vmax.f32 %v2069, 0.0
  %v2078 = vmax.f32 %v2070, 0.0
  %v2079 = vmax.f32 %v2071, 0.0
  %v2080 = vadd.f32 %v2072, %v2074
  %v2081 = vadd.f32 %v2080, %v2076
  %v2082 = vadd.f32 %v2081, %v2078
  %v2083 = vrot.slane %v2082, 4
  %v2084 = vadd.f32 %v2082, %v2083
  %v2085 = vrot.slane %v2084, 2
  %v2086 = vadd.f32 %v2084, %v2085
  %v2087 = vrot.slane %v2086, 1
  %v2088 = vadd.f32 %v2086, %v2087
  %v2089 = vsel %vm181, %v2073, 0.0
  %v2090 = vsel %vm181, %v2075, 0.0
  %v2091 = vadd.f32 %v2089, %v2090
  %v2092 = vsel %vm181, %v2077, 0.0
  %v2093 = vadd.f32 %v2091, %v2092
  %v2094 = vsel %vm181, %v2079, 0.0
  %v2095 = vadd.f32 %v2093, %v2094
  %v2096 = vrot.slane %v2095, 4
  %v2097 = vadd.f32 %v2095, %v2096
  %v2098 = vrot.slane %v2097, 2
  %v2099 = vadd.f32 %v2097, %v2098
  %v2100 = vrot.slane %v2099, 1
  %v2101 = vadd.f32 %v2099, %v2100
  %v2102 = vmul.f32 %v2072, %v2072
  %v2103 = vmul.f32 %v2073, %v2073
  %v2104 = vmul.f32 %v2074, %v2074
  %v2105 = vmul.f32 %v2075, %v2075
  %v2106 = vmul.f32 %v2076, %v2076
  %v2107 = vmul.f32 %v2077, %v2077
  %v2108 = vmul.f32 %v2078, %v2078
  %v2109 = vmul.f32 %v2079, %v2079
  %v2110 = vadd.f32 %v2102, %v2104
  %v2111 = vadd.f32 %v2110, %v2106
  %v2112 = vadd.f32 %v2111, %v2108
  %v2113 = vrot.slane %v2112, 4
  %v2114 = vadd.f32 %v2112, %v2113
  %v2115 = vrot.slane %v2114, 2
  %v2116 = vadd.f32 %v2114, %v2115
  %v2117 = vrot.slane %v2116, 1
  %v2118 = vadd.f32 %v2116, %v2117
  %v2119 = vsel %vm181, %v2103, 0.0
  %v2120 = vsel %vm181, %v2105, 0.0
  %v2121 = vadd.f32 %v2119, %v2120
  %v2122 = vsel %vm181, %v2107, 0.0
  %v2123 = vadd.f32 %v2121, %v2122
  %v2124 = vsel %vm181, %v2109, 0.0
  %v2125 = vadd.f32 %v2123, %v2124
  %v2126 = vrot.slane %v2125, 4
  %v2127 = vadd.f32 %v2125, %v2126
  %v2128 = vrot.slane %v2127, 2
  %v2129 = vadd.f32 %v2127, %v2128
  %v2130 = vrot.slane %v2129, 1
  %v2131 = vadd.f32 %v2129, %v2130
  %v2132 = vsel %vm623, %v2088, %v2118
  %v2133 = vsel %vm623, %v2101, %v2131
  %v2135 = vsel %vm181, %v2133, 0
  %2137 = vmatprep.subr.mxu0 %v24
  %2138 = vmatpush1.msra.mxu0 %v23
  %2139 = vmatprep.subr.mxu0 %v26
  %2140 = vmatpush1.msra.mxu0 %v25
  %2141 = vmatprep.subr.mxu0 %v28
  %2142 = vmatpush1.msra.mxu0 %v27
  %2143 = vmatprep.subr.mxu0 %v30
  %2144 = vmatpush1.msra.mxu0 %v29
  %2145 = vmatprep.subr.mxu0 %v32
  %2146 = vmatpush1.msra.mxu0 %v31
  %2147 = vmatprep.subr.mxu0 %v34
  %2148 = vmatpush1.msra.mxu0 %v33
  %2149 = vmatprep.subr.mxu0 %v36
  %2150 = vmatpush1.msra.mxu0 %v35
  %2151 = vmatprep.subr.mxu0 %v38
  %2152 = vmatpush1.msra.mxu0 %v37
  %2153 = vmatprep.subr.mxu0 %v40
  %2154 = vmatpush1.msra.mxu0 %v39
  %2155 = vmatprep.subr.mxu0 %v42
  %2156 = vmatpush1.msra.mxu0 %v41
  %2157 = vmatprep.subr.mxu0 %v44
  %2158 = vmatpush1.msra.mxu0 %v43
  %2159 = vmatprep.subr.mxu0 %v46
  %2160 = vmatpush1.msra.mxu0 %v45
  %2161 = vmatprep.subr.mxu0 %v48
  %2162 = vmatpush1.msra.mxu0 %v47
  %2163 = vmatprep.subr.mxu0 %v50
  %2164 = vmatpush1.msra.mxu0 %v49
  %2165 = vmatprep.subr.mxu0 %v52
  %2166 = vmatpush1.msra.mxu0 %v51
  %2167 = vmatprep.subr.mxu0 %v54
  %2168 = vmatpush1.msra.mxu0 %v53
  %2169 = vmatprep.subr.mxu0 %v56
  %2170 = vmatpush1.msra.mxu0 %v55
  %2171 = vmatprep.subr.mxu0 %v58
  %2172 = vmatpush1.msra.mxu0 %v57
  %2173 = vmatprep.subr.mxu0 0.0
  %2174 = vmatpush1.msra.mxu0 0.0
  %2175 = vmatprep.subr.mxu0 0.0
  %2176 = vmatpush1.msra.mxu0 0.0
  %2177 = vmatprep.subr.mxu0 0.0
  %2178 = vmatpush1.msra.mxu0 0.0
  %2179 = vmatprep.subr.mxu0 0.0
  %2180 = vmatpush1.msra.mxu0 0.0
  %2181 = vmatprep.subr.mxu0 0.0
  %2182 = vmatpush1.msra.mxu0 0.0
  %2183 = vmatprep.subr.mxu0 0.0
  %2184 = vmatpush1.msra.mxu0 0.0
  %2185 = vmatprep.subr.mxu0 0.0
  %2186 = vmatpush1.msra.mxu0 0.0
  %2187 = vmatprep.subr.mxu0 0.0
  %2188 = vmatpush1.msra.mxu0 0.0
  %2189 = vmatprep.subr.mxu0 0.0
  %2190 = vmatpush1.msra.mxu0 0.0
  %2191 = vmatprep.subr.mxu0 0.0
  %2192 = vmatpush1.msra.mxu0 0.0
  %2193 = vmatprep.subr.mxu0 0.0
  %2194 = vmatpush1.msra.mxu0 0.0
  %2195 = vmatprep.subr.mxu0 0.0
  %2196 = vmatpush1.msra.mxu0 0.0
  %2197 = vmatprep.subr.mxu0 0.0
  %2198 = vmatpush1.msra.mxu0 0.0
  %2199 = vmatprep.subr.mxu0 0.0
  %2200 = vmatpush1.msra.mxu0 0.0
  %2201 = vmatprep.mubr.f32.mxu0 %v2135
  %2202 = vmatmul.mubr.f32.gmra.mrb[0].mxu0 %v2132
  %v2203 = vpop.f32.mrb[0].mxu0
  %v2204 = vadd.f32 0.0, %v2203
  %v2205 = vpop.f32.mrb[0].mxu0
  %v2206 = vadd.f32 0.0, %v2205
  %2207 = vdwg.mxu0
  %v2208 = vmul.f32 %v2204, 0.001953125
  %v2209 = vmul.f32 %v2206, 0.001953125
  %v2210 = vmul.f32 %v2208, %v2208
  %v2211 = vmul.f32 %v2209, %v2209
  %v2214 = vrot.slane %v2210, 7
  %v2215 = vrot.slane %v2211, 7
  %v2218 = vsub.f32 %v2208, %v2214
  %v2219 = vsub.f32 %v2209, %v2215
  %s2220 = scalar_lea.vmem %s3, 4
  %v2221 = vld [vmem:[%s2220] sm:$0x3]
  %v2222 = vadd.f32 %v2218, 1e-05
  %v2223 = vadd.f32 %v2219, 1e-05
  %v2224 = vrsqrt.pop %v2222
  %v2225 = vrsqrt.pop %v2223
  %v2228 = vcombine.low %v2224, %v2225
  %v2230 = vunpack.c.l.s4 1966171168
  %v2231 = vunpack.c.0.s8 %v2230
  %v2232 = vlaneseq
  %v2233 = vshrl.u32 %v2232, 7
  %v2234 = vsub.s32 %v2231, %v2233
  %v2235 = vrot.slane %v2228, %v2234
  %v2236 = vcombine.high %v2235, %v2235
  %v2238 = vunpack.c.l.s4 1966171168
  %v2239 = vunpack.c.0.s8 %v2238
  %v2240 = vlaneseq
  %v2241 = vshrl.u32 %v2240, 7
  %v2242 = vsub.s32 %v2239, %v2241
  %v2243 = vrot.slane %v2236, %v2242
  %v2245 = vmul.f32 %v2221, %v2243
  %v2246 = vlaneseq
  %v2247 = vshrl.u32 %v2246, 7
  %v2248 = vsub.s32 0, %v2247
  %v2249 = vrot.slane %v2208, %v2248
  %v2250 = vlaneseq
  %v2251 = vshrl.u32 %v2250, 7
  %v2252 = vsub.s32 0, %v2251
  %v2253 = vrot.slane %v2209, %v2252
  %v2254 = vsub.f32 %v2072, %v2249
  %v2255 = vsub.f32 %v2073, %v2253
  %v2256 = vsub.f32 %v2074, %v2249
  %v2257 = vsub.f32 %v2075, %v2253
  %v2258 = vsub.f32 %v2076, %v2249
  %v2259 = vsub.f32 %v2077, %v2253
  %v2260 = vsub.f32 %v2078, %v2249
  %v2261 = vsub.f32 %v2079, %v2253
  %v2263 = vlaneseq
  %v2264 = vshrl.u32 %v2263, 7
  %v2265 = vsub.s32 0, %v2264
  %v2266 = vrot.slane %v2245, %v2265
  %v2267 = vlaneseq
  %v2268 = vshrl.u32 %v2267, 7
  %v2269 = vsub.s32 1, %v2268
  %v2270 = vrot.slane %v2245, %v2269
  %v2273 = vmul.f32 %v2254, %v2266
  %v2274 = vmul.f32 %v2255, %v2270
  %v2275 = vmul.f32 %v2256, %v2266
  %v2276 = vmul.f32 %v2257, %v2270
  %v2277 = vmul.f32 %v2258, %v2266
  %v2278 = vmul.f32 %v2259, %v2270
  %v2279 = vmul.f32 %v2260, %v2266
  %v2280 = vmul.f32 %v2261, %v2270
  %s2281 = scalar_lea.vmem %s4, 4
  %v2282 = vld [vmem:[%s2281] sm:$0x3]
  %v2284 = vlaneseq
  %v2285 = vshrl.u32 %v2284, 7
  %v2286 = vsub.s32 0, %v2285
  %v2287 = vrot.slane %v2282, %v2286
  %v2288 = vlaneseq
  %v2289 = vshrl.u32 %v2288, 7
  %v2290 = vsub.s32 1, %v2289
  %v2291 = vrot.slane %v2282, %v2290
  %v2294 = vadd.f32 %v2273, %v2287
  %v2295 = vadd.f32 %v2274, %v2291
  %v2296 = vadd.f32 %v2275, %v2287
  %v2297 = vadd.f32 %v2276, %v2291
  %v2298 = vadd.f32 %v2277, %v2287
  %v2299 = vadd.f32 %v2278, %v2291
  %v2300 = vadd.f32 %v2279, %v2287
  %v2301 = vadd.f32 %v2280, %v2291
  %2302 = vst [vmem:[%s6] sm:$0xff] %v2294
  %2303 = vst.msk [vmem:[%s6 + $0x8] sm:$0xff] %vm181, %v2295
  %2304 = vst [vmem:[%s6 + $0x10] sm:$0xff] %v2296
  %2305 = vst.msk [vmem:[%s6 + $0x18] sm:$0xff] %vm181, %v2297
  %2306 = vst [vmem:[%s6 + $0x20] sm:$0xff] %v2298
  %2307 = vst.msk [vmem:[%s6 + $0x28] sm:$0xff] %vm181, %v2299
  %2308 = vst [vmem:[%s6 + $0x30] sm:$0xff] %v2300
  %2309 = vst.msk [vmem:[%s6 + $0x38] sm:$0xff] %vm181, %v2301
  // Predicated region
  $region26: #{triple_conv_block.1} parent=0 // pred_check
    _
  $region27: #{triple_conv_block.1} parent=0 // pred_check_branch
    %2311 = sbr.rel (0) target = $region29
  $region28: #{triple_conv_block.1} parent=0 // pred_region
    _
  $region29: #{triple_conv_block.1} parent=0 // pred_fallthru
    _
  // Predicated region
  $region30: #{triple_conv_block.1} parent=0 // pred_check
    _
  $region31: #{triple_conv_block.1} parent=0 // pred_check_branch
    %2313 = sbr.rel (0) target = $region33
  $region32: #{triple_conv_block.1} parent=0 // pred_region
    _
  $region33: #{triple_conv_block.1} parent=0 // pred_fallthru
    _

</llo_original>
